<compile_context>
chip_gen: v7x
topology: tpu7x:2x2x1
jax: 0.10.0
libtpu: 0.0.40
codegen_flags: <defaults>
</compile_context>

<pallas_src>
import functools

import jax
import jax.numpy as jnp
from jax.experimental import pallas as pl
from jax.experimental.pallas import tpu as pltpu

NEG_SLOPE = 0.01      # F.leaky_relu default
BN_EPS = 1e-5         # nn.BatchNorm1d default
BN_MOMENTUM = 0.1     # nn.BatchNorm1d default
LANE = 128


def _leaky_relu(x):
    return jnp.where(x > 0, x, NEG_SLOPE * x)


def _round_up(n, m):
    return ((n + m - 1) // m) * m


def _pad_to(a, shape):
    widths = [(0, t - s) for s, t in zip(a.shape, shape)]
    return jnp.pad(a, widths)


# ---------------------------------------------------------------------------
# Stage 1: backbone + fc1 + leaky_relu; emits bf16 features and per-tile BN
# statistics (sum, sum-of-squares).  h1 is NOT written back to HBM — stage 2
# recomputes it from the bf16 features.
# ---------------------------------------------------------------------------
def _stage1_kernel(x_ref, wg_ref, bg_ref, w1_ref, b1_ref,
                   feat_ref, stats_ref, *, tile_b, valid_rows):
    i = pl.program_id(0)
    last = pl.num_programs(0) - 1

    # --- global feature learning model (stand-in: Linear + leaky_relu) ---
    # TODO(synk): the real injected backbone would replace this matmul.
    x = x_ref[...].astype(jnp.bfloat16)                        # in-kernel cast
    feat = _leaky_relu(
        jnp.dot(x, wg_ref[...], preferred_element_type=jnp.float32)
        + bg_ref[...]).astype(jnp.bfloat16)                    # bf16 [tb, 128]
    feat_ref[...] = feat

    # --- classifier.fc1 + leaky_relu (for BN statistics only) ---
    h1 = _leaky_relu(
        jnp.dot(feat, w1_ref[...], preferred_element_type=jnp.float32)
        + b1_ref[...])                                         # f32 [tb, 128]

    # --- per-tile BN statistics (single sweep: sum and sum of squares).
    #     Only the last tile may contain padded / undefined rows, so the
    #     row mask is applied there alone.
    # NOTE: var = E[x^2] - mean^2 can lose precision when |mean| >> std; fine
    # for the post-leaky-relu activations here.
    @pl.when(i != last)
    def _():
        stats_ref[0:1, :] = jnp.sum(h1, axis=0, keepdims=True)
        stats_ref[1:2, :] = jnp.sum(h1 * h1, axis=0, keepdims=True)

    @pl.when(i == last)
    def _():
        row_ids = (jax.lax.broadcasted_iota(jnp.int32, (tile_b, 1), 0)
                   + i * tile_b)
        h1m = jnp.where(row_ids < valid_rows, h1, 0.0)
        stats_ref[0:1, :] = jnp.sum(h1m, axis=0, keepdims=True)
        stats_ref[1:2, :] = jnp.sum(h1m * h1m, axis=0, keepdims=True)


# ---------------------------------------------------------------------------
# Stage 2: recompute fc1 from bf16 features, BN normalize (global scale/shift)
# + fc3 + leaky_relu + fc2.
# ---------------------------------------------------------------------------
def _stage2_kernel(feat_ref, w1_ref, b1_ref, scale_ref, shift_ref,
                   w3_ref, b3_ref, w2_ref, b2_ref, out_ref):
    feat = feat_ref[...]                                       # bf16 [tb, 128]
    h1 = _leaky_relu(
        jnp.dot(feat, w1_ref[...], preferred_element_type=jnp.float32)
        + b1_ref[...])                                         # f32 [tb, 128]
    h1n = h1 * scale_ref[...] + shift_ref[...]
    h3 = _leaky_relu(
        jnp.dot(h1n.astype(jnp.bfloat16), w3_ref[...],
                preferred_element_type=jnp.float32)
        + b3_ref[...])
    out = jnp.dot(h3.astype(jnp.bfloat16), w2_ref[...],
                  preferred_element_type=jnp.float32) + b2_ref[...]
    out_ref[...] = out.astype(out_ref.dtype)


def fedmaldetect_forward(x, params, *, tile_b=512):
    """Fused FEDMALDETECT forward.

    Returns (output, classifier_state, features), mirroring the PyTorch
    `(output, self.classifier, features)` return.
    """
    B, d_in = x.shape
    feat_dim = params["wg"].shape[1]          # 32 (forced by fc1)
    hidden = params["w1"].shape[1]
    mid = params["w3"].shape[1]               # 64
    out_dim = params["w2"].shape[1]

    # Lane-dense (128-padded) feature widths.
    feat_p = _round_up(feat_dim, LANE)
    hid_p = _round_up(hidden, LANE)
    mid_p = _round_up(mid, LANE)
    out_p = _round_up(out_dim, LANE)

    # Batch tiling.  The ragged tail is handled inside the kernels (Pallas
    # block padding + valid-row mask), so no wrapper-side pad/cast of x.
    # Keep >= 2 grid tiles when the batch permits so both v7x TensorCores
    # get work under dimension_semantics=("parallel",).
    tile_b = min(_round_up(max(int(tile_b), 8), 8), _round_up(B, 8))
    if B > 8:
        tile_b = min(tile_b, _round_up(pl.cdiv(B, 2), 8))
    n_tiles = pl.cdiv(B, tile_b)

    # Weights: bf16 matmul operands (f32 accumulation inside the kernels).
    wg = _pad_to(params["wg"], (d_in, feat_p)).astype(jnp.bfloat16)
    bg = _pad_to(params["bg"].reshape(1, -1), (1, feat_p)).astype(jnp.float32)
    w1 = _pad_to(params["w1"], (feat_p, hid_p)).astype(jnp.bfloat16)
    b1 = _pad_to(params["b1"].reshape(1, -1), (1, hid_p)).astype(jnp.float32)
    gamma = _pad_to(params["gamma"].reshape(1, -1), (1, hid_p)).astype(jnp.float32)
    beta = _pad_to(params["beta"].reshape(1, -1), (1, hid_p)).astype(jnp.float32)
    w3 = _pad_to(params["w3"], (hid_p, mid_p)).astype(jnp.bfloat16)
    b3 = _pad_to(params["b3"].reshape(1, -1), (1, mid_p)).astype(jnp.float32)
    w2 = _pad_to(params["w2"], (mid_p, out_p)).astype(jnp.bfloat16)
    b2 = _pad_to(params["b2"].reshape(1, -1), (1, out_p)).astype(jnp.float32)

    const2 = lambda i: (0, 0)      # weights: VMEM-resident across batch tiles
    row_tile = lambda i: (i, 0)

    cparams = pltpu.CompilerParams(
        dimension_semantics=("parallel",),       # batch tiles are independent
        vmem_limit_bytes=32 * 1024 * 1024,       # safe on v5e/v6e/v7x (64 MiB)
    )

    # ---- stage 1: bf16 features + per-tile BN stats -------------------------
    stage1 = pl.pallas_call(
        functools.partial(_stage1_kernel, tile_b=tile_b, valid_rows=B),
        out_shape=(
            jax.ShapeDtypeStruct((B, feat_p), jnp.bfloat16),
            jax.ShapeDtypeStruct((n_tiles * 8, hid_p), jnp.float32),
        ),
        grid_spec=pltpu.PrefetchScalarGridSpec(
            num_scalar_prefetch=0,
            grid=(n_tiles,),
            in_specs=[
                pl.BlockSpec((tile_b, d_in), row_tile),
                pl.BlockSpec((d_in, feat_p), const2),
                pl.BlockSpec((1, feat_p), const2),
                pl.BlockSpec((feat_p, hid_p), const2),
                pl.BlockSpec((1, hid_p), const2),
            ],
            out_specs=[
                pl.BlockSpec((tile_b, feat_p), row_tile),
                pl.BlockSpec((8, hid_p), row_tile),
            ],
        ),
        compiler_params=cparams,
    )
    feat_buf, stats = stage1(x, wg, bg, w1, b1)

    # ---- global BN stats (tiny [n_tiles, 2, hid_p] reduction in JAX) -------
    stats3 = stats.reshape(n_tiles, 8, hid_p)
    inv_n = 1.0 / B
    mean = jnp.sum(stats3[:, 0, :], axis=0) * inv_n
    msq = jnp.sum(stats3[:, 1, :], axis=0) * inv_n
    var = jnp.maximum(msq - mean * mean, 0.0)          # biased (BN forward)
    scale = gamma[0] * jax.lax.rsqrt(var + BN_EPS)
    shift = beta[0] - mean * scale
    scale = scale.reshape(1, hid_p)
    shift = shift.reshape(1, hid_p)

    # ---- stage 2: recompute fc1, normalize, fc3 + leaky_relu + fc2 ----------
    stage2 = pl.pallas_call(
        _stage2_kernel,
        out_shape=jax.ShapeDtypeStruct((B, out_p), jnp.bfloat16),
        grid_spec=pltpu.PrefetchScalarGridSpec(
            num_scalar_prefetch=0,
            grid=(n_tiles,),
            in_specs=[
                pl.BlockSpec((tile_b, feat_p), row_tile),
                pl.BlockSpec((feat_p, hid_p), const2),
                pl.BlockSpec((1, hid_p), const2),
                pl.BlockSpec((1, hid_p), const2),
                pl.BlockSpec((1, hid_p), const2),
                pl.BlockSpec((hid_p, mid_p), const2),
                pl.BlockSpec((1, mid_p), const2),
                pl.BlockSpec((mid_p, out_p), const2),
                pl.BlockSpec((1, out_p), const2),
            ],
            out_specs=pl.BlockSpec((tile_b, out_p), row_tile),
        ),
        compiler_params=cparams,
    )
    out_buf = stage2(feat_buf, w1, b1, scale, shift, w3, b3, w2, b2)

    output = out_buf[:, :out_dim].astype(jnp.float32)
    features = feat_buf[:, :feat_dim].astype(jnp.float32)

    # ---- BatchNorm running-stat momentum update (training-mode parity) -----
    mean_h = mean[:hidden]
    var_h = var[:hidden]
    unbias = B / max(B - 1, 1)                 # PyTorch uses unbiased var here
    new_running_mean = (1.0 - BN_MOMENTUM) * params["running_mean"] \
        + BN_MOMENTUM * mean_h
    new_running_var = (1.0 - BN_MOMENTUM) * params["running_var"] \
        + BN_MOMENTUM * var_h * unbias

    # TODO(synk): PyTorch returns the nn.Module `self.classifier`; we return
    # its parameter/state pytree instead.
    classifier_state = {
        k: params[k] for k in ("w1", "b1", "gamma", "beta", "w3", "b3",
                               "w2", "b2")
    }
    classifier_state["running_mean"] = new_running_mean
    classifier_state["running_var"] = new_running_var
    return output, classifier_state, features


def init_params(key, input_dim, hidden_dim, output_dim):
    ks = jax.random.split(key, 4)

    def lin(k, fan_in, fan_out):
        w = jax.random.normal(k, (fan_in, fan_out), jnp.float32) * 0.1
        b = jnp.linspace(-0.05, 0.05, fan_out, dtype=jnp.float32)
        return w, b

    wg, bg = lin(ks[0], input_dim, 32)
    w1, b1 = lin(ks[1], 32, hidden_dim)
    w3, b3 = lin(ks[2], hidden_dim, 64)
    w2, b2 = lin(ks[3], 64, output_dim)
    return {
        "wg": wg, "bg": bg,
        "w1": w1, "b1": b1,
        "gamma": jnp.ones((hidden_dim,), jnp.float32),
        "beta": jnp.zeros((hidden_dim,), jnp.float32),
        "running_mean": jnp.zeros((hidden_dim,), jnp.float32),
        "running_var": jnp.ones((hidden_dim,), jnp.float32),
        "w3": w3, "b3": b3,
        "w2": w2, "b2": b2,
    }


def reference_forward(x, params):
    """Pure-JAX reference with the same bf16-operand / f32-accumulate policy."""
    bf16 = jnp.bfloat16

    def lin(a, w, b):
        return jnp.dot(a.astype(bf16), w.astype(bf16),
                       preferred_element_type=jnp.float32) + b.reshape(1, -1)

    feat = _leaky_relu(lin(x, params["wg"], params["bg"]))
    h1 = _leaky_relu(lin(feat, params["w1"], params["b1"]))
    mean = jnp.mean(h1, axis=0, keepdims=True)
    var = jnp.mean((h1 - mean) ** 2, axis=0, keepdims=True)
    h1n = ((h1 - mean) * jax.lax.rsqrt(var + BN_EPS)
           * params["gamma"].reshape(1, -1) + params["beta"].reshape(1, -1))
    h3 = _leaky_relu(lin(h1n, params["w3"], params["b3"]))
    out = lin(h3, params["w2"], params["b2"])
    return out, feat


if __name__ == "__main__":
    key = jax.random.PRNGKey(0)
    k_x, k_p = jax.random.split(key)

    batch = 300            # ragged vs. the two-tile split -> exercises BN mask
    input_dim = 64
    hidden_dim = 32
    output_dim = 4

    x = jax.random.normal(k_x, (batch, input_dim), jnp.float32)
    params = init_params(k_p, input_dim, hidden_dim, output_dim)

    fwd = jax.jit(fedmaldetect_forward)
    output, classifier_state, features = fwd(x, params)
    jax.block_until_ready((output, features))

    ref_out, ref_feat = reference_forward(x, params)

    assert output.shape == (batch, output_dim)
    assert features.shape == (batch, 32)
    assert classifier_state["running_mean"].shape == (hidden_dim,)
    assert bool(jnp.allclose(output, ref_out, rtol=3e-2, atol=3e-2)), \
        float(jnp.max(jnp.abs(output - ref_out)))
    assert bool(jnp.allclose(features, ref_feat, rtol=3e-2, atol=3e-2)), \
        float(jnp.max(jnp.abs(features - ref_feat)))
    print("KERNEL_OK")
</pallas_src>

<mosaic_0001>
module attributes {stable_mosaic.version = 11 : i64} {
  func.func @_stage1_kernel(%arg0: i32, %arg1: memref<152x64xf32, #tpu.memory_space<vmem>>, %arg2: memref<64x128xbf16, #tpu.memory_space<vmem>>, %arg3: memref<1x128xf32, #tpu.memory_space<vmem>>, %arg4: memref<128x128xbf16, #tpu.memory_space<vmem>>, %arg5: memref<1x128xf32, #tpu.memory_space<vmem>>, %arg6: memref<152x128xbf16, #tpu.memory_space<vmem>>, %arg7: memref<8x128xf32, #tpu.memory_space<vmem>>) attributes {dimension_semantics = [#tpu.dimension_semantics<parallel>], iteration_bounds = array<i64: 2>, scalar_prefetch = 0 : i64, scratch_operands = 0 : i64, tpu.core_type = #tpu.core_type<tc>, window_params = [{transform_indices = @transform_0, window_bounds = array<i64: 152, 64>}, {pipeline_mode = #tpu.pipeline_mode<synchronous>, transform_indices = @transform_1, window_bounds = array<i64: 64, 128>}, {pipeline_mode = #tpu.pipeline_mode<synchronous>, transform_indices = @transform_2, window_bounds = array<i64: 1, 128>}, {pipeline_mode = #tpu.pipeline_mode<synchronous>, transform_indices = @transform_3, window_bounds = array<i64: 128, 128>}, {pipeline_mode = #tpu.pipeline_mode<synchronous>, transform_indices = @transform_4, window_bounds = array<i64: 1, 128>}, {transform_indices = @transform_5, window_bounds = array<i64: 152, 128>}, {transform_indices = @transform_6, window_bounds = array<i64: 8, 128>}]} {
    %c0 = arith.constant 0 : index
    %c0_0 = arith.constant 0 : index
    %0 = vector.load %arg1[%c0, %c0_0] : memref<152x64xf32, #tpu.memory_space<vmem>>, vector<152x64xf32>
    %1 = arith.truncf %0 : vector<152x64xf32> to vector<152x64xbf16>
    %c0_1 = arith.constant 0 : index
    %c0_2 = arith.constant 0 : index
    %2 = vector.load %arg2[%c0_1, %c0_2] : memref<64x128xbf16, #tpu.memory_space<vmem>>, vector<64x128xbf16>
    %cst = arith.constant dense<0.000000e+00> : vector<152x128xf32>
    %3 = tpu.matmul %1, %2, %cst {dimension_numbers = #tpu.dot_dimension_numbers<[1], [0], [0], [1], [0, 0, 1, 1], [], []>} : vector<152x64xbf16>, vector<64x128xbf16>, vector<152x128xf32> -> vector<152x128xf32>
    %c0_3 = arith.constant 0 : index
    %c0_4 = arith.constant 0 : index
    %4 = vector.load %arg3[%c0_3, %c0_4] : memref<1x128xf32, #tpu.memory_space<vmem>>, vector<1x128xf32>
    %5 = vector.broadcast %4 : vector<1x128xf32> to vector<152x128xf32>
    %6 = arith.addf %3, %5 : vector<152x128xf32>
    %cst_5 = arith.constant 0.000000e+00 : f32
    %7 = vector.broadcast %cst_5 : f32 to vector<152x128xf32>
    %8 = arith.cmpf ogt, %6, %7 : vector<152x128xf32>
    %cst_6 = arith.constant 0.00999999977 : f32
    %9 = vector.broadcast %cst_6 : f32 to vector<152x128xf32>
    %10 = arith.mulf %9, %6 : vector<152x128xf32>
    %11 = arith.select %8, %6, %10 : vector<152x128xi1>, vector<152x128xf32>
    %12 = arith.truncf %11 : vector<152x128xf32> to vector<152x128xbf16>
    %c0_7 = arith.constant 0 : index
    %c0_8 = arith.constant 0 : index
    %13 = vector.load %arg6[%c0_7, %c0_8] : memref<152x128xbf16, #tpu.memory_space<vmem>>, vector<152x128xbf16>
    tpu.vector_store %arg6[%c0_7, %c0_8], %12 {strides = array<i32>} : memref<152x128xbf16, #tpu.memory_space<vmem>>, vector<152x128xbf16>,
    %c0_9 = arith.constant 0 : index
    %c0_10 = arith.constant 0 : index
    %14 = vector.load %arg4[%c0_9, %c0_10] : memref<128x128xbf16, #tpu.memory_space<vmem>>, vector<128x128xbf16>
    %cst_11 = arith.constant dense<0.000000e+00> : vector<152x128xf32>
    %15 = tpu.matmul %12, %14, %cst_11 {dimension_numbers = #tpu.dot_dimension_numbers<[1], [0], [0], [1], [0, 0, 1, 1], [], []>} : vector<152x128xbf16>, vector<128x128xbf16>, vector<152x128xf32> -> vector<152x128xf32>
    %c0_12 = arith.constant 0 : index
    %c0_13 = arith.constant 0 : index
    %16 = vector.load %arg5[%c0_12, %c0_13] : memref<1x128xf32, #tpu.memory_space<vmem>>, vector<1x128xf32>
    %17 = vector.broadcast %16 : vector<1x128xf32> to vector<152x128xf32>
    %18 = arith.addf %15, %17 : vector<152x128xf32>
    %cst_14 = arith.constant 0.000000e+00 : f32
    %19 = vector.broadcast %cst_14 : f32 to vector<152x128xf32>
    %20 = arith.cmpf ogt, %18, %19 : vector<152x128xf32>
    %cst_15 = arith.constant 0.00999999977 : f32
    %21 = vector.broadcast %cst_15 : f32 to vector<152x128xf32>
    %22 = arith.mulf %21, %18 : vector<152x128xf32>
    %23 = arith.select %20, %18, %22 : vector<152x128xi1>, vector<152x128xf32>
    %c1_i32 = arith.constant 1 : i32
    %24 = arith.cmpi ne, %arg0, %c1_i32 : i32
    %25 = arith.extui %24 : i1 to i32
    %c0_i32 = arith.constant 0 : i32
    %26 = arith.cmpi ne, %25, %c0_i32 : i32
    scf.if %26 {
      %cst_18 = arith.constant dense<0.000000e+00> : vector<128xf32>
      %30 = vector.multi_reduction <add>, %23, %cst_18 [0] : vector<152x128xf32> to vector<128xf32>
      %31 = vector.shape_cast %30 : vector<128xf32> to vector<1x128xf32>
      %c0_19 = arith.constant 0 : index
      %c0_20 = arith.constant 0 : index
      %32 = vector.load %arg7[%c0_19, %c0_20] : memref<8x128xf32, #tpu.memory_space<vmem>>, vector<1x128xf32>
      tpu.vector_store %arg7[%c0_19, %c0_20], %31 {strides = array<i32>} : memref<8x128xf32, #tpu.memory_space<vmem>>, vector<1x128xf32>,
      %33 = arith.mulf %23, %23 : vector<152x128xf32>
      %cst_21 = arith.constant dense<0.000000e+00> : vector<128xf32>
      %34 = vector.multi_reduction <add>, %33, %cst_21 [0] : vector<152x128xf32> to vector<128xf32>
      %35 = vector.shape_cast %34 : vector<128xf32> to vector<1x128xf32>
      %c1 = arith.constant 1 : index
      %c0_22 = arith.constant 0 : index
      %36 = vector.load %arg7[%c1, %c0_22] : memref<8x128xf32, #tpu.memory_space<vmem>>, vector<1x128xf32>
      tpu.vector_store %arg7[%c1, %c0_22], %35 {strides = array<i32>} : memref<8x128xf32, #tpu.memory_space<vmem>>, vector<1x128xf32>,
    } else {
    }
    %c1_i32_16 = arith.constant 1 : i32
    %27 = arith.cmpi eq, %arg0, %c1_i32_16 : i32
    %28 = arith.extui %27 : i1 to i32
    %c0_i32_17 = arith.constant 0 : i32
    %29 = arith.cmpi ne, %28, %c0_i32_17 : i32
    scf.if %29 {
      %30 = tpu.iota {dimensions = array<i32: 0>} : vector<152x1xi32>
      %c152_i32 = arith.constant 152 : i32
      %31 = arith.muli %arg0, %c152_i32 : i32
      %32 = vector.broadcast %31 : i32 to vector<152x1xi32>
      %33 = arith.addi %30, %32 : vector<152x1xi32>
      %c300_i32 = arith.constant 300 : i32
      %34 = vector.broadcast %c300_i32 : i32 to vector<152x1xi32>
      %35 = arith.cmpi slt, %33, %34 : vector<152x1xi32>
      %cst_18 = arith.constant 0.000000e+00 : f32
      %36 = vector.shape_cast %35 : vector<152x1xi1> to vector<152x1xi1>
      %37 = vector.broadcast %36 : vector<152x1xi1> to vector<152x128xi1>
      %38 = vector.broadcast %cst_18 : f32 to vector<152x128xf32>
      %39 = arith.select %37, %23, %38 : vector<152x128xi1>, vector<152x128xf32>
      %cst_19 = arith.constant dense<0.000000e+00> : vector<128xf32>
      %40 = vector.multi_reduction <add>, %39, %cst_19 [0] : vector<152x128xf32> to vector<128xf32>
      %41 = vector.shape_cast %40 : vector<128xf32> to vector<1x128xf32>
      %c0_20 = arith.constant 0 : index
      %c0_21 = arith.constant 0 : index
      %42 = vector.load %arg7[%c0_20, %c0_21] : memref<8x128xf32, #tpu.memory_space<vmem>>, vector<1x128xf32>
      tpu.vector_store %arg7[%c0_20, %c0_21], %41 {strides = array<i32>} : memref<8x128xf32, #tpu.memory_space<vmem>>, vector<1x128xf32>,
      %43 = arith.mulf %39, %39 : vector<152x128xf32>
      %cst_22 = arith.constant dense<0.000000e+00> : vector<128xf32>
      %44 = vector.multi_reduction <add>, %43, %cst_22 [0] : vector<152x128xf32> to vector<128xf32>
      %45 = vector.shape_cast %44 : vector<128xf32> to vector<1x128xf32>
      %c1 = arith.constant 1 : index
      %c0_23 = arith.constant 0 : index
      %46 = vector.load %arg7[%c1, %c0_23] : memref<8x128xf32, #tpu.memory_space<vmem>>, vector<1x128xf32>
      tpu.vector_store %arg7[%c1, %c0_23], %45 {strides = array<i32>} : memref<8x128xf32, #tpu.memory_space<vmem>>, vector<1x128xf32>,
    } else {
    }
    return
  }
  func.func @transform_0(%arg0: i32) -> (i32, i32) {
    %c0_i32 = arith.constant 0 : i32
    %c0_i32_0 = arith.constant 0 : i32
    return %arg0, %c0_i32 : i32, i32
  }
  func.func @transform_1(%arg0: i32) -> (i32, i32) {
    %c0_i32 = arith.constant 0 : i32
    %c0_i32_0 = arith.constant 0 : i32
    %c0_i32_1 = arith.constant 0 : i32
    return %c0_i32, %c0_i32_0 : i32, i32
  }
  func.func @transform_2(%arg0: i32) -> (i32, i32) {
    %c0_i32 = arith.constant 0 : i32
    %c0_i32_0 = arith.constant 0 : i32
    %c0_i32_1 = arith.constant 0 : i32
    return %c0_i32, %c0_i32_0 : i32, i32
  }
  func.func @transform_3(%arg0: i32) -> (i32, i32) {
    %c0_i32 = arith.constant 0 : i32
    %c0_i32_0 = arith.constant 0 : i32
    %c0_i32_1 = arith.constant 0 : i32
    return %c0_i32, %c0_i32_0 : i32, i32
  }
  func.func @transform_4(%arg0: i32) -> (i32, i32) {
    %c0_i32 = arith.constant 0 : i32
    %c0_i32_0 = arith.constant 0 : i32
    %c0_i32_1 = arith.constant 0 : i32
    return %c0_i32, %c0_i32_0 : i32, i32
  }
  func.func @transform_5(%arg0: i32) -> (i32, i32) {
    %c0_i32 = arith.constant 0 : i32
    %c0_i32_0 = arith.constant 0 : i32
    return %arg0, %c0_i32 : i32, i32
  }
  func.func @transform_6(%arg0: i32) -> (i32, i32) {
    %c0_i32 = arith.constant 0 : i32
    %c0_i32_0 = arith.constant 0 : i32
    return %arg0, %c0_i32 : i32, i32
  }
}

module attributes {stable_mosaic.version = 11 : i64} {
  func.func @_stage2_kernel(%arg0: i32, %arg1: memref<152x128xbf16, #tpu.memory_space<vmem>>, %arg2: memref<128x128xbf16, #tpu.memory_space<vmem>>, %arg3: memref<1x128xf32, #tpu.memory_space<vmem>>, %arg4: memref<1x128xf32, #tpu.memory_space<vmem>>, %arg5: memref<1x128xf32, #tpu.memory_space<vmem>>, %arg6: memref<128x128xbf16, #tpu.memory_space<vmem>>, %arg7: memref<1x128xf32, #tpu.memory_space<vmem>>, %arg8: memref<128x128xbf16, #tpu.memory_space<vmem>>, %arg9: memref<1x128xf32, #tpu.memory_space<vmem>>, %arg10: memref<152x128xbf16, #tpu.memory_space<vmem>>) attributes {dimension_semantics = [#tpu.dimension_semantics<parallel>], iteration_bounds = array<i64: 2>, scalar_prefetch = 0 : i64, scratch_operands = 0 : i64, tpu.core_type = #tpu.core_type<tc>, window_params = [{transform_indices = @transform_0, window_bounds = array<i64: 152, 128>}, {pipeline_mode = #tpu.pipeline_mode<synchronous>, transform_indices = @transform_1, window_bounds = array<i64: 128, 128>}, {pipeline_mode = #tpu.pipeline_mode<synchronous>, transform_indices = @transform_2, window_bounds = array<i64: 1, 128>}, {pipeline_mode = #tpu.pipeline_mode<synchronous>, transform_indices = @transform_3, window_bounds = array<i64: 1, 128>}, {pipeline_mode = #tpu.pipeline_mode<synchronous>, transform_indices = @transform_4, window_bounds = array<i64: 1, 128>}, {pipeline_mode = #tpu.pipeline_mode<synchronous>, transform_indices = @transform_5, window_bounds = array<i64: 128, 128>}, {pipeline_mode = #tpu.pipeline_mode<synchronous>, transform_indices = @transform_6, window_bounds = array<i64: 1, 128>}, {pipeline_mode = #tpu.pipeline_mode<synchronous>, transform_indices = @transform_7, window_bounds = array<i64: 128, 128>}, {pipeline_mode = #tpu.pipeline_mode<synchronous>, transform_indices = @transform_8, window_bounds = array<i64: 1, 128>}, {transform_indices = @transform_9, window_bounds = array<i64: 152, 128>}]} {
    %c0 = arith.constant 0 : index
    %c0_0 = arith.constant 0 : index
    %0 = vector.load %arg1[%c0, %c0_0] : memref<152x128xbf16, #tpu.memory_space<vmem>>, vector<152x128xbf16>
    %c0_1 = arith.constant 0 : index
    %c0_2 = arith.constant 0 : index
    %1 = vector.load %arg2[%c0_1, %c0_2] : memref<128x128xbf16, #tpu.memory_space<vmem>>, vector<128x128xbf16>
    %cst = arith.constant dense<0.000000e+00> : vector<152x128xf32>
    %2 = tpu.matmul %0, %1, %cst {dimension_numbers = #tpu.dot_dimension_numbers<[1], [0], [0], [1], [0, 0, 1, 1], [], []>} : vector<152x128xbf16>, vector<128x128xbf16>, vector<152x128xf32> -> vector<152x128xf32>
    %c0_3 = arith.constant 0 : index
    %c0_4 = arith.constant 0 : index
    %3 = vector.load %arg3[%c0_3, %c0_4] : memref<1x128xf32, #tpu.memory_space<vmem>>, vector<1x128xf32>
    %4 = vector.broadcast %3 : vector<1x128xf32> to vector<152x128xf32>
    %5 = arith.addf %2, %4 : vector<152x128xf32>
    %cst_5 = arith.constant 0.000000e+00 : f32
    %6 = vector.broadcast %cst_5 : f32 to vector<152x128xf32>
    %7 = arith.cmpf ogt, %5, %6 : vector<152x128xf32>
    %cst_6 = arith.constant 0.00999999977 : f32
    %8 = vector.broadcast %cst_6 : f32 to vector<152x128xf32>
    %9 = arith.mulf %8, %5 : vector<152x128xf32>
    %10 = arith.select %7, %5, %9 : vector<152x128xi1>, vector<152x128xf32>
    %c0_7 = arith.constant 0 : index
    %c0_8 = arith.constant 0 : index
    %11 = vector.load %arg4[%c0_7, %c0_8] : memref<1x128xf32, #tpu.memory_space<vmem>>, vector<1x128xf32>
    %12 = vector.broadcast %11 : vector<1x128xf32> to vector<152x128xf32>
    %13 = arith.mulf %10, %12 : vector<152x128xf32>
    %c0_9 = arith.constant 0 : index
    %c0_10 = arith.constant 0 : index
    %14 = vector.load %arg5[%c0_9, %c0_10] : memref<1x128xf32, #tpu.memory_space<vmem>>, vector<1x128xf32>
    %15 = vector.broadcast %14 : vector<1x128xf32> to vector<152x128xf32>
    %16 = arith.addf %13, %15 : vector<152x128xf32>
    %17 = arith.truncf %16 : vector<152x128xf32> to vector<152x128xbf16>
    %c0_11 = arith.constant 0 : index
    %c0_12 = arith.constant 0 : index
    %18 = vector.load %arg6[%c0_11, %c0_12] : memref<128x128xbf16, #tpu.memory_space<vmem>>, vector<128x128xbf16>
    %cst_13 = arith.constant dense<0.000000e+00> : vector<152x128xf32>
    %19 = tpu.matmul %17, %18, %cst_13 {dimension_numbers = #tpu.dot_dimension_numbers<[1], [0], [0], [1], [0, 0, 1, 1], [], []>} : vector<152x128xbf16>, vector<128x128xbf16>, vector<152x128xf32> -> vector<152x128xf32>
    %c0_14 = arith.constant 0 : index
    %c0_15 = arith.constant 0 : index
    %20 = vector.load %arg7[%c0_14, %c0_15] : memref<1x128xf32, #tpu.memory_space<vmem>>, vector<1x128xf32>
    %21 = vector.broadcast %20 : vector<1x128xf32> to vector<152x128xf32>
    %22 = arith.addf %19, %21 : vector<152x128xf32>
    %cst_16 = arith.constant 0.000000e+00 : f32
    %23 = vector.broadcast %cst_16 : f32 to vector<152x128xf32>
    %24 = arith.cmpf ogt, %22, %23 : vector<152x128xf32>
    %cst_17 = arith.constant 0.00999999977 : f32
    %25 = vector.broadcast %cst_17 : f32 to vector<152x128xf32>
    %26 = arith.mulf %25, %22 : vector<152x128xf32>
    %27 = arith.select %24, %22, %26 : vector<152x128xi1>, vector<152x128xf32>
    %28 = arith.truncf %27 : vector<152x128xf32> to vector<152x128xbf16>
    %c0_18 = arith.constant 0 : index
    %c0_19 = arith.constant 0 : index
    %29 = vector.load %arg8[%c0_18, %c0_19] : memref<128x128xbf16, #tpu.memory_space<vmem>>, vector<128x128xbf16>
    %cst_20 = arith.constant dense<0.000000e+00> : vector<152x128xf32>
    %30 = tpu.matmul %28, %29, %cst_20 {dimension_numbers = #tpu.dot_dimension_numbers<[1], [0], [0], [1], [0, 0, 1, 1], [], []>} : vector<152x128xbf16>, vector<128x128xbf16>, vector<152x128xf32> -> vector<152x128xf32>
    %c0_21 = arith.constant 0 : index
    %c0_22 = arith.constant 0 : index
    %31 = vector.load %arg9[%c0_21, %c0_22] : memref<1x128xf32, #tpu.memory_space<vmem>>, vector<1x128xf32>
    %32 = vector.broadcast %31 : vector<1x128xf32> to vector<152x128xf32>
    %33 = arith.addf %30, %32 : vector<152x128xf32>
    %34 = arith.truncf %33 : vector<152x128xf32> to vector<152x128xbf16>
    %c0_23 = arith.constant 0 : index
    %c0_24 = arith.constant 0 : index
    %35 = vector.load %arg10[%c0_23, %c0_24] : memref<152x128xbf16, #tpu.memory_space<vmem>>, vector<152x128xbf16>
    tpu.vector_store %arg10[%c0_23, %c0_24], %34 {strides = array<i32>} : memref<152x128xbf16, #tpu.memory_space<vmem>>, vector<152x128xbf16>,
    return
  }
  func.func @transform_0(%arg0: i32) -> (i32, i32) {
    %c0_i32 = arith.constant 0 : i32
    %c0_i32_0 = arith.constant 0 : i32
    return %arg0, %c0_i32 : i32, i32
  }
  func.func @transform_1(%arg0: i32) -> (i32, i32) {
    %c0_i32 = arith.constant 0 : i32
    %c0_i32_0 = arith.constant 0 : i32
    %c0_i32_1 = arith.constant 0 : i32
    return %c0_i32, %c0_i32_0 : i32, i32
  }
  func.func @transform_2(%arg0: i32) -> (i32, i32) {
    %c0_i32 = arith.constant 0 : i32
    %c0_i32_0 = arith.constant 0 : i32
    %c0_i32_1 = arith.constant 0 : i32
    return %c0_i32, %c0_i32_0 : i32, i32
  }
  func.func @transform_3(%arg0: i32) -> (i32, i32) {
    %c0_i32 = arith.constant 0 : i32
    %c0_i32_0 = arith.constant 0 : i32
    %c0_i32_1 = arith.constant 0 : i32
    return %c0_i32, %c0_i32_0 : i32, i32
  }
  func.func @transform_4(%arg0: i32) -> (i32, i32) {
    %c0_i32 = arith.constant 0 : i32
    %c0_i32_0 = arith.constant 0 : i32
    %c0_i32_1 = arith.constant 0 : i32
    return %c0_i32, %c0_i32_0 : i32, i32
  }
  func.func @transform_5(%arg0: i32) -> (i32, i32) {
    %c0_i32 = arith.constant 0 : i32
    %c0_i32_0 = arith.constant 0 : i32
    %c0_i32_1 = arith.constant 0 : i32
    return %c0_i32, %c0_i32_0 : i32, i32
  }
  func.func @transform_6(%arg0: i32) -> (i32, i32) {
    %c0_i32 = arith.constant 0 : i32
    %c0_i32_0 = arith.constant 0 : i32
    %c0_i32_1 = arith.constant 0 : i32
    return %c0_i32, %c0_i32_0 : i32, i32
  }
  func.func @transform_7(%arg0: i32) -> (i32, i32) {
    %c0_i32 = arith.constant 0 : i32
    %c0_i32_0 = arith.constant 0 : i32
    %c0_i32_1 = arith.constant 0 : i32
    return %c0_i32, %c0_i32_0 : i32, i32
  }
  func.func @transform_8(%arg0: i32) -> (i32, i32) {
    %c0_i32 = arith.constant 0 : i32
    %c0_i32_0 = arith.constant 0 : i32
    %c0_i32_1 = arith.constant 0 : i32
    return %c0_i32, %c0_i32_0 : i32, i32
  }
  func.func @transform_9(%arg0: i32) -> (i32, i32) {
    %c0_i32 = arith.constant 0 : i32
    %c0_i32_0 = arith.constant 0 : i32
    return %arg0, %c0_i32 : i32, i32
  }
}

</mosaic_0001>

<llo_original>
// kernel: fedmaldetect_forward.2
$region0: #{fedmaldetect_forward.2}
  #allocation0 [shape = 'u32[]', space=smem, size = 0x4, offset = 0x4, fixed_abs, tag = 'smem constant byte address 0x4 - core index']
  #allocation1 [shape = 'u32[144,128]{1,0:T(1,128)}', space=vmem, size = 0x12000, scoped, tag = 'internal scratch']
  %s0 = inlined_call_operand.vmem [shape: f32[300,64], index: 0, kind: input, shape index: {}]
  %s1 = inlined_call_operand.vmem [shape: bf16[64,128], index: 1, kind: input, shape index: {}]
  %s2 = inlined_call_operand.vmem [shape: f32[1,128], index: 2, kind: input, shape index: {}]
  %s3 = inlined_call_operand.vmem [shape: bf16[128,128], index: 3, kind: input, shape index: {}]
  %s4 = inlined_call_operand.vmem [shape: f32[1,128], index: 4, kind: input, shape index: {}]
  %s5 = inlined_call_operand.vmem [shape: bf16[300,128], index: 5, kind: output, shape index: {0}]
  %s6 = inlined_call_operand.vmem [shape: f32[16,128], index: 6, kind: output, shape index: {1}]
  %7 = xla_tuple %s5, %s6
  %s8 = sld [smem:[#allocation0]]
  $region69: #{fedmaldetect_forward.2} parent=0
    _
  %s10 = ssub.s32 1, %s8
  %s11 = scalar_select 0, %s10, %s8
  loop: start=0, step=1, limit=4
  $region2: #{fedmaldetect_forward.2} parent=0 // loop_pre_header
    _
  $region3: #{fedmaldetect_forward.2} parent=0 // loop_header
    %s13 = sphi 0, %s17
    %p14 = scmp.ge.s32.totalorder %s13, 4
    %s23 = sphi 0, %s25
    %s26 = sphi 0, %s23
    %s27 = sphi 0, %s26
    %s43 = sphi 0, %s27
    %s47 = sphi 0, %s47
    %s49 = sphi 0, %s47
    %s50 = sphi 0, %s49
    %s64 = sphi 0, %s50
    %s68 = sphi 0, %s68
    %s70 = sphi 0, %s68
    %s71 = sphi 0, %s70
    %s85 = sphi 0, %s71
    %s89 = sphi 0, %s89
    %s91 = sphi 0, %s89
    %s92 = sphi 0, %s91
    %s106 = sphi 0, %s92
    %s110 = sphi 0, %s110
    %s112 = sphi 0, %s110
    %s113 = sphi 0, %s112
    %s127 = sphi 0, %s113
    %s133 = sphi 0, %s135
    %s136 = sphi 0, %s133
    %s137 = sphi 0, %s136
    %s153 = sphi 0, %s137
    %s159 = sphi 0, %s161
    %s162 = sphi 0, %s159
    %s163 = sphi 0, %s162
    %s179 = sphi 0, %s163
  $region4: #{fedmaldetect_forward.2} parent=0 // loop_header_branch
    %16 = sbr.rel (%p14) target = $region8
  $region5: #{fedmaldetect_forward.2} parent=0 // loop_body
    %s18 = ssub.s32 %s13, 1
    %s19 = ssub.s32 %s13, 2
    %s20 = sadd.s32 %s13, 1
    %s21 = ssub.s32 %s13, %s20
    %p22 = scmp.eq.s32.totalorder %s21, 0
    %s24 = sadd.s32 %s23, 1
    %s25 = scalar_select %p22, %s23, %s24
    %p28 = pneg %p22
    %p29 = scmp.eq.s32.totalorder %s13, 1
    %p30 = por %p28, %p29
    %p31 = scmp.ne.s32.totalorder %s23, %s26
    %p32 = scmp.eq.s32.totalorder %s13, 0
    %p33 = por %p31, %p32
    %p34 = scmp.ne.s32.totalorder %s23, %s26
    %p35 = scmp.eq.s32.totalorder %s18, 1
    %p36 = por %p34, %p35
    %p37 = scmp.ne.s32.totalorder %s26, %s27
    %p38 = scmp.eq.s32.totalorder %s18, 0
    %p39 = por %p37, %p38
    %p40 = scmp.ne.s32.totalorder %s26, %s27
    %p41 = scmp.eq.s32.totalorder %s19, 1
    %p42 = por %p40, %p41
    %p44 = scmp.ne.s32.totalorder %s27, %s43
    %p45 = scmp.eq.s32.totalorder %s19, 0
    %p46 = por %p44, %p45
    %s48 = sadd.s32 %s47, 1
    %p51 = scmp.eq.s32.totalorder %s13, 1
    %p52 = scmp.ne.s32.totalorder %s47, %s49
    %p53 = scmp.eq.s32.totalorder %s13, 0
    %p54 = por %p52, %p53
    %p55 = scmp.ne.s32.totalorder %s47, %s49
    %p56 = scmp.eq.s32.totalorder %s18, 1
    %p57 = por %p55, %p56
    %p58 = scmp.ne.s32.totalorder %s49, %s50
    %p59 = scmp.eq.s32.totalorder %s18, 0
    %p60 = por %p58, %p59
    %p61 = scmp.ne.s32.totalorder %s49, %s50
    %p62 = scmp.eq.s32.totalorder %s19, 1
    %p63 = por %p61, %p62
    %p65 = scmp.ne.s32.totalorder %s50, %s64
    %p66 = scmp.eq.s32.totalorder %s19, 0
    %p67 = por %p65, %p66
    %s69 = sadd.s32 %s68, 1
    %p72 = scmp.eq.s32.totalorder %s13, 1
    %p73 = scmp.ne.s32.totalorder %s68, %s70
    %p74 = scmp.eq.s32.totalorder %s13, 0
    %p75 = por %p73, %p74
    %p76 = scmp.ne.s32.totalorder %s68, %s70
    %p77 = scmp.eq.s32.totalorder %s18, 1
    %p78 = por %p76, %p77
    %p79 = scmp.ne.s32.totalorder %s70, %s71
    %p80 = scmp.eq.s32.totalorder %s18, 0
    %p81 = por %p79, %p80
    %p82 = scmp.ne.s32.totalorder %s70, %s71
    %p83 = scmp.eq.s32.totalorder %s19, 1
    %p84 = por %p82, %p83
    %p86 = scmp.ne.s32.totalorder %s71, %s85
    %p87 = scmp.eq.s32.totalorder %s19, 0
    %p88 = por %p86, %p87
    %s90 = sadd.s32 %s89, 1
    %p93 = scmp.eq.s32.totalorder %s13, 1
    %p94 = scmp.ne.s32.totalorder %s89, %s91
    %p95 = scmp.eq.s32.totalorder %s13, 0
    %p96 = por %p94, %p95
    %p97 = scmp.ne.s32.totalorder %s89, %s91
    %p98 = scmp.eq.s32.totalorder %s18, 1
    %p99 = por %p97, %p98
    %p100 = scmp.ne.s32.totalorder %s91, %s92
    %p101 = scmp.eq.s32.totalorder %s18, 0
    %p102 = por %p100, %p101
    %p103 = scmp.ne.s32.totalorder %s91, %s92
    %p104 = scmp.eq.s32.totalorder %s19, 1
    %p105 = por %p103, %p104
    %p107 = scmp.ne.s32.totalorder %s92, %s106
    %p108 = scmp.eq.s32.totalorder %s19, 0
    %p109 = por %p107, %p108
    %s111 = sadd.s32 %s110, 1
    %p114 = scmp.eq.s32.totalorder %s13, 1
    %p115 = scmp.ne.s32.totalorder %s110, %s112
    %p116 = scmp.eq.s32.totalorder %s13, 0
    %p117 = por %p115, %p116
    %p118 = scmp.ne.s32.totalorder %s110, %s112
    %p119 = scmp.eq.s32.totalorder %s18, 1
    %p120 = por %p118, %p119
    %p121 = scmp.ne.s32.totalorder %s112, %s113
    %p122 = scmp.eq.s32.totalorder %s18, 0
    %p123 = por %p121, %p122
    %p124 = scmp.ne.s32.totalorder %s112, %s113
    %p125 = scmp.eq.s32.totalorder %s19, 1
    %p126 = por %p124, %p125
    %p128 = scmp.ne.s32.totalorder %s113, %s127
    %p129 = scmp.eq.s32.totalorder %s19, 0
    %p130 = por %p128, %p129
    %s131 = ssub.s32 %s13, %s20
    %p132 = scmp.eq.s32.totalorder %s131, 0
    %s134 = sadd.s32 %s133, 1
    %s135 = scalar_select %p132, %s133, %s134
    %p138 = pneg %p132
    %p139 = scmp.eq.s32.totalorder %s13, 1
    %p140 = por %p138, %p139
    %p141 = scmp.ne.s32.totalorder %s133, %s136
    %p142 = scmp.eq.s32.totalorder %s13, 0
    %p143 = por %p141, %p142
    %p144 = scmp.ne.s32.totalorder %s133, %s136
    %p145 = scmp.eq.s32.totalorder %s18, 1
    %p146 = por %p144, %p145
    %p147 = scmp.ne.s32.totalorder %s136, %s137
    %p148 = scmp.eq.s32.totalorder %s18, 0
    %p149 = por %p147, %p148
    %p150 = scmp.ne.s32.totalorder %s136, %s137
    %p151 = scmp.eq.s32.totalorder %s19, 1
    %p152 = por %p150, %p151
    %p154 = scmp.ne.s32.totalorder %s137, %s153
    %p155 = scmp.eq.s32.totalorder %s19, 0
    %p156 = por %p154, %p155
    %s157 = ssub.s32 %s13, %s20
    %p158 = scmp.eq.s32.totalorder %s157, 0
    %s160 = sadd.s32 %s159, 1
    %s161 = scalar_select %p158, %s159, %s160
    %p164 = pneg %p158
    %p165 = scmp.eq.s32.totalorder %s13, 1
    %p166 = por %p164, %p165
    %p167 = scmp.ne.s32.totalorder %s159, %s162
    %p168 = scmp.eq.s32.totalorder %s13, 0
    %p169 = por %p167, %p168
    %p170 = scmp.ne.s32.totalorder %s159, %s162
    %p171 = scmp.eq.s32.totalorder %s18, 1
    %p172 = por %p170, %p171
    %p173 = scmp.ne.s32.totalorder %s162, %s163
    %p174 = scmp.eq.s32.totalorder %s18, 0
    %p175 = por %p173, %p174
    %p176 = scmp.ne.s32.totalorder %s162, %s163
    %p177 = scmp.eq.s32.totalorder %s19, 1
    %p178 = por %p176, %p177
    %p180 = scmp.ne.s32.totalorder %s163, %s179
    %p181 = scmp.eq.s32.totalorder %s19, 0
    %p182 = por %p180, %p181
    %p183 = scmp.le.s32.totalorder 1, %s13
    %p184 = scmp.lt.s32.totalorder %s13, 3
    %p185 = pnand %p183, %p184
    %p186 = pneg %p185
    // Predicated region
    $region9: #{fedmaldetect_forward.2} parent=5 // pred_check
      _
    $region10: #{fedmaldetect_forward.2} parent=5 // pred_check_branch
      %188 = sbr.rel (%p185) target = $region12
    $region11: #{fedmaldetect_forward.2} parent=5 // pred_region
      %s189 = ssub.s32 %s13, 1
      // Predicated region
      $region13: #{fedmaldetect_forward.2} parent=11 // pred_check
        %p190 = pneg %p60
      $region14: #{fedmaldetect_forward.2} parent=11 // pred_check_branch
        %192 = sbr.rel (%p190) target = $region16
      $region15: #{fedmaldetect_forward.2} parent=11 // pred_region
        _
      $region16: #{fedmaldetect_forward.2} parent=11 // pred_fallthru
        _
      // Predicated region
      $region17: #{fedmaldetect_forward.2} parent=11 // pred_check
        %p193 = pneg %p81
      $region18: #{fedmaldetect_forward.2} parent=11 // pred_check_branch
        %195 = sbr.rel (%p193) target = $region20
      $region19: #{fedmaldetect_forward.2} parent=11 // pred_region
        _
      $region20: #{fedmaldetect_forward.2} parent=11 // pred_fallthru
        _
      // Predicated region
      $region21: #{fedmaldetect_forward.2} parent=11 // pred_check
        %p196 = pneg %p102
      $region22: #{fedmaldetect_forward.2} parent=11 // pred_check_branch
        %198 = sbr.rel (%p196) target = $region24
      $region23: #{fedmaldetect_forward.2} parent=11 // pred_region
        _
      $region24: #{fedmaldetect_forward.2} parent=11 // pred_fallthru
        _
      // Predicated region
      $region25: #{fedmaldetect_forward.2} parent=11 // pred_check
        %p199 = pneg %p123
      $region26: #{fedmaldetect_forward.2} parent=11 // pred_check_branch
        %201 = sbr.rel (%p199) target = $region28
      $region27: #{fedmaldetect_forward.2} parent=11 // pred_region
        _
      $region28: #{fedmaldetect_forward.2} parent=11 // pred_fallthru
        _
    $region12: #{fedmaldetect_forward.2} parent=5 // pred_fallthru
      _
    %p202 = scmp.lt.s32.totalorder %s13, 2
    // Predicated region
    $region29: #{fedmaldetect_forward.2} parent=5 // pred_check
      %p203 = pneg %p202
    $region30: #{fedmaldetect_forward.2} parent=5 // pred_check_branch
      %205 = sbr.rel (%p203) target = $region32
    $region31: #{fedmaldetect_forward.2} parent=5 // pred_region
      // Predicated region
      $region33: #{fedmaldetect_forward.2} parent=31 // pred_check
        %p206 = pneg %p33
      $region34: #{fedmaldetect_forward.2} parent=31 // pred_check_branch
        %208 = sbr.rel (%p206) target = $region36
      $region35: #{fedmaldetect_forward.2} parent=31 // pred_region
        %s209 = smul.u32 19, %s13
        %p210 = scmp.lt.s32.totalorder %s209, 37
        %s211 = scalar_select %p210, %s209, 37
        %s212 = smul.addr %s211, 8
        %s213 = scalar_lea.vmem %s0, %s212
        %s214 = smul.u32 19, %s13
      $region36: #{fedmaldetect_forward.2} parent=31 // pred_fallthru
        _
    $region32: #{fedmaldetect_forward.2} parent=5 // pred_fallthru
      _
    %p215 = scmp.le.s32.totalorder 1, %s13
    %p216 = scmp.lt.s32.totalorder %s13, 3
    %p217 = pnand %p215, %p216
    %p218 = pneg %p217
    // Predicated region
    $region37: #{fedmaldetect_forward.2} parent=5 // pred_check
      _
    $region38: #{fedmaldetect_forward.2} parent=5 // pred_check_branch
      %220 = sbr.rel (%p217) target = $region40
    $region39: #{fedmaldetect_forward.2} parent=5 // pred_region
      %s221 = ssub.s32 %s13, 1
      %s222 = smul.u32 19, %s18
      %p223 = scmp.lt.s32.totalorder %s222, 37
      %s224 = scalar_select %p223, %s222, 37
      %s225 = smul.addr %s224, 8
      %s226 = scalar_lea.vmem %s0, %s225
      %p227 = pneg %p39
      %p228 = pneg %p36
      %p229 = pneg %p60
      %p230 = pneg %p57
      %p231 = pneg %p81
      %p232 = pneg %p78
      %p233 = pneg %p102
      %p234 = pneg %p99
      %p235 = pneg %p123
      %p236 = pneg %p120
      %p237 = pneg %p149
      %p238 = pneg %p146
      %s239 = smul.u32 19, %s18
      %p240 = scmp.lt.s32.totalorder %s239, 37
      %s241 = scalar_select %p240, %s239, 37
      %s242 = smul.addr %s241, 4
      %s243 = scalar_lea.vmem %s5, %s242
      %p244 = pneg %p175
      %p245 = pneg %p172
      %p246 = scmp.lt.s32.totalorder %s18, 1
      %s247 = scalar_select %p246, %s18, 1
      %s248 = smul.addr %s247, 8
      %s249 = scalar_lea.vmem %s6, %s248
      %s250 = smul.u32 19, %s18
      %p251 = scmp.lt.s32.totalorder %s250, 37
      %s252 = scalar_select %p251, %s250, 37
      %s253 = smul.addr %s252, 8
      %s254 = scalar_lea.vmem %s0, %s253
      %s255 = smul.u32 19, %s18
      %s256 = smul.u32 19, %s18
      %p257 = scmp.lt.s32.totalorder %s256, 37
      %s258 = scalar_select %p257, %s256, 37
      %s259 = smul.addr %s258, 4
      %s260 = scalar_lea.vmem %s5, %s259
      %s261 = smul.u32 19, %s18
      %p262 = scmp.lt.s32.totalorder %s18, 1
      %s263 = scalar_select %p262, %s18, 1
      %s264 = smul.addr %s263, 8
      %s265 = scalar_lea.vmem %s6, %s264
      %v267 = vld [vmem:[%s254] sm:$0xff]
      %v268 = vld [vmem:[%s254 + $0x8] sm:$0xff]
      %v269 = vld [vmem:[%s254 + $0x10] sm:$0xff]
      %v270 = vld [vmem:[%s254 + $0x18] sm:$0xff]
      %v271 = vld [vmem:[%s254 + $0x20] sm:$0xff]
      %v272 = vld [vmem:[%s254 + $0x28] sm:$0xff]
      %v273 = vld [vmem:[%s254 + $0x30] sm:$0xff]
      %v274 = vld [vmem:[%s254 + $0x38] sm:$0xff]
      %v275 = vld [vmem:[%s254 + $0x40] sm:$0xff]
      %v276 = vld [vmem:[%s254 + $0x48] sm:$0xff]
      %v277 = vld [vmem:[%s254 + $0x50] sm:$0xff]
      %v278 = vld [vmem:[%s254 + $0x58] sm:$0xff]
      %v279 = vld [vmem:[%s254 + $0x60] sm:$0xff]
      %v280 = vld [vmem:[%s254 + $0x68] sm:$0xff]
      %v281 = vld [vmem:[%s254 + $0x70] sm:$0xff]
      %v282 = vld [vmem:[%s254 + $0x78] sm:$0xff]
      %v283 = vld [vmem:[%s254 + $0x80] sm:$0xff]
      %v284 = vld [vmem:[%s254 + $0x88] sm:$0xff]
      %v285 = vld [vmem:[%s254 + $0x90] sm:$0xff]
      %v286 = vpack.c.bf16 %v268, %v267
      %v287 = vpack.c.bf16 %v270, %v269
      %v288 = vpack.c.bf16 %v272, %v271
      %v289 = vpack.c.bf16 %v274, %v273
      %v290 = vpack.c.bf16 %v276, %v275
      %v291 = vpack.c.bf16 %v278, %v277
      %v292 = vpack.c.bf16 %v280, %v279
      %v293 = vpack.c.bf16 %v282, %v281
      %v294 = vpack.c.bf16 %v284, %v283
      %v295 = vpack.c.bf16 %v285, %v285
      %v296 = vld [vmem:[%s1] sm:$0xf]
      %v297 = vld [vmem:[%s1 + $0x4] sm:$0xf]
      %v298 = vld [vmem:[%s1 + $0x8] sm:$0xf]
      %v299 = vld [vmem:[%s1 + $0xc] sm:$0xf]
      %v300 = vld [vmem:[%s1 + $0x10] sm:$0xf]
      %v301 = vld [vmem:[%s1 + $0x14] sm:$0xf]
      %v302 = vld [vmem:[%s1 + $0x18] sm:$0xf]
      %v303 = vld [vmem:[%s1 + $0x1c] sm:$0xf]
      %v304 = vld [vmem:[%s2] sm:$0x1]
      %v306 = vlaneseq
      %v307 = vshrl.u32 %v306, 7
      %v308 = vsub.s32 0, %v307
      %v309 = vrot.slane %v304, %v308
      %v319 = vunpack.c.l.b16 %v296
      %v320 = vunpack.c.l.b16 %v297
      %v321 = vunpack.c.l.b16 %v298
      %v322 = vunpack.c.l.b16 %v299
      %v323 = vunpack.c.l.b16 %v300
      %v324 = vunpack.c.l.b16 %v301
      %v325 = vunpack.c.l.b16 %v302
      %v326 = vunpack.c.l.b16 %v303
      %v327 = vpack.c.b16 %v320, %v319
      %v328 = vpack.c.b16 %v322, %v321
      %v329 = vpack.c.b16 %v324, %v323
      %v330 = vpack.c.b16 %v326, %v325
      %vm335 = vcmask 523264
      %v337 = vsel %vm335, %v286, 0
      %v340 = vsel %vm335, %v287, 0
      %v343 = vsel %vm335, %v288, 0
      %v346 = vsel %vm335, %v289, 0
      %v349 = vsel %vm335, %v290, 0
      %v352 = vsel %vm335, %v291, 0
      %v355 = vsel %vm335, %v292, 0
      %v358 = vsel %vm335, %v293, 0
      %v361 = vsel %vm335, %v294, 0
      %v364 = vsel %vm335, %v295, 0
      %366 = vmatprep.subr.bf16.mxu0 0
      %367 = vmatpush1.bf16.msra.mxu0 %v327
      %368 = vmatprep.subr.bf16.mxu0 0
      %369 = vmatpush1.bf16.msra.mxu0 %v328
      %370 = vmatprep.subr.bf16.mxu0 0
      %371 = vmatpush1.bf16.msra.mxu0 %v329
      %372 = vmatprep.subr.bf16.mxu0 0
      %373 = vmatpush1.bf16.msra.mxu0 %v330
      %374 = vmatprep.subr.bf16.mxu0 0
      %375 = vmatpush1.bf16.msra.mxu0 0
      %376 = vmatprep.subr.bf16.mxu0 0
      %377 = vmatpush1.bf16.msra.mxu0 0
      %378 = vmatprep.subr.bf16.mxu0 0
      %379 = vmatpush1.bf16.msra.mxu0 0
      %380 = vmatprep.subr.bf16.mxu0 0
      %381 = vmatpush1.bf16.msra.mxu0 0
      %382 = vmatprep.subr.bf16.mxu0 0
      %383 = vmatpush1.bf16.msra.mxu0 0
      %384 = vmatprep.subr.bf16.mxu0 0
      %385 = vmatpush1.bf16.msra.mxu0 0
      %386 = vmatprep.subr.bf16.mxu0 0
      %387 = vmatpush1.bf16.msra.mxu0 0
      %388 = vmatprep.subr.bf16.mxu0 0
      %389 = vmatpush1.bf16.msra.mxu0 0
      %390 = vmatprep.subr.bf16.mxu0 0
      %391 = vmatpush1.bf16.msra.mxu0 0
      %392 = vmatprep.subr.bf16.mxu0 0
      %393 = vmatpush1.bf16.msra.mxu0 0
      %394 = vmatprep.subr.bf16.mxu0 0
      %395 = vmatpush1.bf16.msra.mxu0 0
      %396 = vmatprep.subr.bf16.mxu0 0
      %397 = vmatpush1.bf16.msra.mxu0 0
      %398 = vmatprep.mubr.bf16.mxu0 0
      %399 = vmatmul.mubr.bf16.gmra.mrb[0].mxu0 %v337
      %v400 = vpop.f32.mrb[0].mxu0
      %v401 = vadd.f32 %v309, %v400
      %v402 = vpop.f32.mrb[0].mxu0
      %v403 = vpop.f32.mrb[0].mxu0
      %v404 = vadd.f32 %v309, %v403
      %v405 = vpop.f32.mrb[0].mxu0
      %406 = vmatprep.mubr.bf16.mxu0 0
      %407 = vmatmul.mubr.bf16.gmra.mrb[0].mxu0 %v340
      %v408 = vpop.f32.mrb[0].mxu0
      %v409 = vadd.f32 %v309, %v408
      %v410 = vpop.f32.mrb[0].mxu0
      %v411 = vpop.f32.mrb[0].mxu0
      %v412 = vadd.f32 %v309, %v411
      %v413 = vpop.f32.mrb[0].mxu0
      %414 = vmatprep.mubr.bf16.mxu0 0
      %415 = vmatmul.mubr.bf16.gmra.mrb[0].mxu0 %v343
      %v416 = vpop.f32.mrb[0].mxu0
      %v417 = vadd.f32 %v309, %v416
      %v418 = vpop.f32.mrb[0].mxu0
      %v419 = vpop.f32.mrb[0].mxu0
      %v420 = vadd.f32 %v309, %v419
      %v421 = vpop.f32.mrb[0].mxu0
      %422 = vmatprep.mubr.bf16.mxu0 0
      %423 = vmatmul.mubr.bf16.gmra.mrb[0].mxu0 %v346
      %v424 = vpop.f32.mrb[0].mxu0
      %v425 = vadd.f32 %v309, %v424
      %v426 = vpop.f32.mrb[0].mxu0
      %v427 = vpop.f32.mrb[0].mxu0
      %v428 = vadd.f32 %v309, %v427
      %v429 = vpop.f32.mrb[0].mxu0
      %430 = vmatprep.mubr.bf16.mxu0 0
      %431 = vmatmul.mubr.bf16.gmra.mrb[0].mxu0 %v349
      %v432 = vpop.f32.mrb[0].mxu0
      %v433 = vadd.f32 %v309, %v432
      %v434 = vpop.f32.mrb[0].mxu0
      %v435 = vpop.f32.mrb[0].mxu0
      %v436 = vadd.f32 %v309, %v435
      %v437 = vpop.f32.mrb[0].mxu0
      %438 = vmatprep.mubr.bf16.mxu0 0
      %439 = vmatmul.mubr.bf16.gmra.mrb[0].mxu0 %v352
      %v440 = vpop.f32.mrb[0].mxu0
      %v441 = vadd.f32 %v309, %v440
      %v442 = vpop.f32.mrb[0].mxu0
      %v443 = vpop.f32.mrb[0].mxu0
      %v444 = vadd.f32 %v309, %v443
      %v445 = vpop.f32.mrb[0].mxu0
      %446 = vmatprep.mubr.bf16.mxu0 0
      %447 = vmatmul.mubr.bf16.gmra.mrb[0].mxu0 %v355
      %v448 = vpop.f32.mrb[0].mxu0
      %v449 = vadd.f32 %v309, %v448
      %v450 = vpop.f32.mrb[0].mxu0
      %v451 = vpop.f32.mrb[0].mxu0
      %v452 = vadd.f32 %v309, %v451
      %v453 = vpop.f32.mrb[0].mxu0
      %454 = vmatprep.mubr.bf16.mxu0 0
      %455 = vmatmul.mubr.bf16.gmra.mrb[0].mxu0 %v358
      %v456 = vpop.f32.mrb[0].mxu0
      %v457 = vadd.f32 %v309, %v456
      %v458 = vpop.f32.mrb[0].mxu0
      %v459 = vpop.f32.mrb[0].mxu0
      %v460 = vadd.f32 %v309, %v459
      %v461 = vpop.f32.mrb[0].mxu0
      %462 = vmatprep.mubr.bf16.mxu0 0
      %463 = vmatmul.mubr.bf16.gmra.mrb[0].mxu0 %v361
      %v464 = vpop.f32.mrb[0].mxu0
      %v465 = vadd.f32 %v309, %v464
      %v466 = vpop.f32.mrb[0].mxu0
      %v467 = vpop.f32.mrb[0].mxu0
      %v468 = vadd.f32 %v309, %v467
      %v469 = vpop.f32.mrb[0].mxu0
      %470 = vmatprep.mubr.bf16.mxu0 0
      %471 = vmatmul.mubr.bf16.gmra.mrb[0].mxu0 %v364
      %v472 = vpop.f32.mrb[0].mxu0
      %v473 = vadd.f32 %v309, %v472
      %v474 = vpop.f32.mrb[0].mxu0
      %v475 = vpop.f32.mrb[0].mxu0
      %v476 = vpop.f32.mrb[0].mxu0
      %477 = vdwg.mxu0
      %vm478 = vcmp.gt.f32.partialorder %v401, 0.0
      %vm479 = vcmp.gt.f32.partialorder %v404, 0.0
      %vm480 = vcmp.gt.f32.partialorder %v409, 0.0
      %vm481 = vcmp.gt.f32.partialorder %v412, 0.0
      %vm482 = vcmp.gt.f32.partialorder %v417, 0.0
      %vm483 = vcmp.gt.f32.partialorder %v420, 0.0
      %vm484 = vcmp.gt.f32.partialorder %v425, 0.0
      %vm485 = vcmp.gt.f32.partialorder %v428, 0.0
      %vm486 = vcmp.gt.f32.partialorder %v433, 0.0
      %vm487 = vcmp.gt.f32.partialorder %v436, 0.0
      %vm488 = vcmp.gt.f32.partialorder %v441, 0.0
      %vm489 = vcmp.gt.f32.partialorder %v444, 0.0
      %vm490 = vcmp.gt.f32.partialorder %v449, 0.0
      %vm491 = vcmp.gt.f32.partialorder %v452, 0.0
      %vm492 = vcmp.gt.f32.partialorder %v457, 0.0
      %vm493 = vcmp.gt.f32.partialorder %v460, 0.0
      %vm494 = vcmp.gt.f32.partialorder %v465, 0.0
      %vm495 = vcmp.gt.f32.partialorder %v468, 0.0
      %vm496 = vcmp.gt.f32.partialorder %v473, 0.0
      %v497 = vmul.f32 %v401, 0.01
      %v498 = vmul.f32 %v404, 0.01
      %v499 = vmul.f32 %v409, 0.01
      %v500 = vmul.f32 %v412, 0.01
      %v501 = vmul.f32 %v417, 0.01
      %v502 = vmul.f32 %v420, 0.01
      %v503 = vmul.f32 %v425, 0.01
      %v504 = vmul.f32 %v428, 0.01
      %v505 = vmul.f32 %v433, 0.01
      %v506 = vmul.f32 %v436, 0.01
      %v507 = vmul.f32 %v441, 0.01
      %v508 = vmul.f32 %v444, 0.01
      %v509 = vmul.f32 %v449, 0.01
      %v510 = vmul.f32 %v452, 0.01
      %v511 = vmul.f32 %v457, 0.01
      %v512 = vmul.f32 %v460, 0.01
      %v513 = vmul.f32 %v465, 0.01
      %v514 = vmul.f32 %v468, 0.01
      %v515 = vmul.f32 %v473, 0.01
      %v516 = vsel %vm478, %v401, %v497
      %v517 = vsel %vm479, %v404, %v498
      %v518 = vsel %vm480, %v409, %v499
      %v519 = vsel %vm481, %v412, %v500
      %v520 = vsel %vm482, %v417, %v501
      %v521 = vsel %vm483, %v420, %v502
      %v522 = vsel %vm484, %v425, %v503
      %v523 = vsel %vm485, %v428, %v504
      %v524 = vsel %vm486, %v433, %v505
      %v525 = vsel %vm487, %v436, %v506
      %v526 = vsel %vm488, %v441, %v507
      %v527 = vsel %vm489, %v444, %v508
      %v528 = vsel %vm490, %v449, %v509
      %v529 = vsel %vm491, %v452, %v510
      %v530 = vsel %vm492, %v457, %v511
      %v531 = vsel %vm493, %v460, %v512
      %v532 = vsel %vm494, %v465, %v513
      %v533 = vsel %vm495, %v468, %v514
      %v534 = vsel %vm496, %v473, %v515
      %v535 = vpack.c.bf16 %v517, %v516
      %v536 = vpack.c.bf16 %v519, %v518
      %v537 = vpack.c.bf16 %v521, %v520
      %v538 = vpack.c.bf16 %v523, %v522
      %v539 = vpack.c.bf16 %v525, %v524
      %v540 = vpack.c.bf16 %v527, %v526
      %v541 = vpack.c.bf16 %v529, %v528
      %v542 = vpack.c.bf16 %v531, %v530
      %v543 = vpack.c.bf16 %v533, %v532
      %v544 = vpack.c.bf16 %v534, %v534
      %v555 = vunpack.c.l.b16 %v535
      %v556 = vunpack.c.h.b16 %v535
      %v557 = vunpack.c.l.b16 %v536
      %v558 = vunpack.c.h.b16 %v536
      %v559 = vunpack.c.l.b16 %v537
      %v560 = vunpack.c.h.b16 %v537
      %v561 = vunpack.c.l.b16 %v538
      %v562 = vunpack.c.h.b16 %v538
      %v563 = vunpack.c.l.b16 %v539
      %v564 = vunpack.c.h.b16 %v539
      %v565 = vunpack.c.l.b16 %v540
      %v566 = vunpack.c.h.b16 %v540
      %v567 = vunpack.c.l.b16 %v541
      %v568 = vunpack.c.h.b16 %v541
      %v569 = vunpack.c.l.b16 %v542
      %v570 = vunpack.c.h.b16 %v542
      %v571 = vunpack.c.l.b16 %v543
      %v572 = vunpack.c.h.b16 %v543
      %v573 = vunpack.c.l.b16 %v544
      %v574 = vpack.c.b16 %v555, %v555
      %v575 = vpack.c.b16 %v556, %v556
      %v576 = vpack.c.b16 %v557, %v557
      %v577 = vpack.c.b16 %v558, %v558
      %v578 = vpack.c.b16 %v559, %v559
      %v579 = vpack.c.b16 %v560, %v560
      %v580 = vpack.c.b16 %v561, %v561
      %v581 = vpack.c.b16 %v562, %v562
      %v582 = vpack.c.b16 %v563, %v563
      %v583 = vpack.c.b16 %v564, %v564
      %v584 = vpack.c.b16 %v565, %v565
      %v585 = vpack.c.b16 %v566, %v566
      %v586 = vpack.c.b16 %v567, %v567
      %v587 = vpack.c.b16 %v568, %v568
      %v588 = vpack.c.b16 %v569, %v569
      %v589 = vpack.c.b16 %v570, %v570
      %v590 = vpack.c.b16 %v571, %v571
      %v591 = vpack.c.b16 %v572, %v572
      %v592 = vpack.c.b16 %v573, %v573
      %612 = vst [vmem:[%s260] sm:$0xf] %v574
      %613 = vst [vmem:[%s260 + $0x4] sm:$0xf] %v575
      %614 = vst [vmem:[%s260 + $0x8] sm:$0xf] %v576
      %615 = vst [vmem:[%s260 + $0xc] sm:$0xf] %v577
      %616 = vst [vmem:[%s260 + $0x10] sm:$0xf] %v578
      %617 = vst [vmem:[%s260 + $0x14] sm:$0xf] %v579
      %618 = vst [vmem:[%s260 + $0x18] sm:$0xf] %v580
      %619 = vst [vmem:[%s260 + $0x1c] sm:$0xf] %v581
      %620 = vst [vmem:[%s260 + $0x20] sm:$0xf] %v582
      %621 = vst [vmem:[%s260 + $0x24] sm:$0xf] %v583
      %622 = vst [vmem:[%s260 + $0x28] sm:$0xf] %v584
      %623 = vst [vmem:[%s260 + $0x2c] sm:$0xf] %v585
      %624 = vst [vmem:[%s260 + $0x30] sm:$0xf] %v586
      %625 = vst [vmem:[%s260 + $0x34] sm:$0xf] %v587
      %626 = vst [vmem:[%s260 + $0x38] sm:$0xf] %v588
      %627 = vst [vmem:[%s260 + $0x3c] sm:$0xf] %v589
      %628 = vst [vmem:[%s260 + $0x40] sm:$0xf] %v590
      %629 = vst [vmem:[%s260 + $0x44] sm:$0xf] %v591
      %630 = vst [vmem:[%s260 + $0x48] sm:$0xf] %v592
      %v631 = vld [vmem:[%s3] sm:$0xf]
      %v632 = vld [vmem:[%s3 + $0x4] sm:$0xf]
      %v633 = vld [vmem:[%s3 + $0x8] sm:$0xf]
      %v634 = vld [vmem:[%s3 + $0xc] sm:$0xf]
      %v635 = vld [vmem:[%s3 + $0x10] sm:$0xf]
      %v636 = vld [vmem:[%s3 + $0x14] sm:$0xf]
      %v637 = vld [vmem:[%s3 + $0x18] sm:$0xf]
      %v638 = vld [vmem:[%s3 + $0x1c] sm:$0xf]
      %v639 = vld [vmem:[%s3 + $0x20] sm:$0xf]
      %v640 = vld [vmem:[%s3 + $0x24] sm:$0xf]
      %v641 = vld [vmem:[%s3 + $0x28] sm:$0xf]
      %v642 = vld [vmem:[%s3 + $0x2c] sm:$0xf]
      %v643 = vld [vmem:[%s3 + $0x30] sm:$0xf]
      %v644 = vld [vmem:[%s3 + $0x34] sm:$0xf]
      %v645 = vld [vmem:[%s3 + $0x38] sm:$0xf]
      %v646 = vld [vmem:[%s3 + $0x3c] sm:$0xf]
      %v647 = vld [vmem:[%s4] sm:$0x1]
      %v649 = vlaneseq
      %v650 = vshrl.u32 %v649, 7
      %v651 = vsub.s32 0, %v650
      %v652 = vrot.slane %v647, %v651
      %v670 = vunpack.c.l.b16 %v631
      %v671 = vunpack.c.l.b16 %v632
      %v672 = vunpack.c.l.b16 %v633
      %v673 = vunpack.c.l.b16 %v634
      %v674 = vunpack.c.l.b16 %v635
      %v675 = vunpack.c.l.b16 %v636
      %v676 = vunpack.c.l.b16 %v637
      %v677 = vunpack.c.l.b16 %v638
      %v678 = vunpack.c.l.b16 %v639
      %v679 = vunpack.c.l.b16 %v640
      %v680 = vunpack.c.l.b16 %v641
      %v681 = vunpack.c.l.b16 %v642
      %v682 = vunpack.c.l.b16 %v643
      %v683 = vunpack.c.l.b16 %v644
      %v684 = vunpack.c.l.b16 %v645
      %v685 = vunpack.c.l.b16 %v646
      %v686 = vpack.c.b16 %v671, %v670
      %v687 = vpack.c.b16 %v673, %v672
      %v688 = vpack.c.b16 %v675, %v674
      %v689 = vpack.c.b16 %v677, %v676
      %v690 = vpack.c.b16 %v679, %v678
      %v691 = vpack.c.b16 %v681, %v680
      %v692 = vpack.c.b16 %v683, %v682
      %v693 = vpack.c.b16 %v685, %v684
      %702 = vmatprep.subr.bf16.mxu0 0
      %703 = vmatpush1.bf16.msra.mxu0 %v686
      %704 = vmatprep.subr.bf16.mxu0 0
      %705 = vmatpush1.bf16.msra.mxu0 %v687
      %706 = vmatprep.subr.bf16.mxu0 0
      %707 = vmatpush1.bf16.msra.mxu0 %v688
      %708 = vmatprep.subr.bf16.mxu0 0
      %709 = vmatpush1.bf16.msra.mxu0 %v689
      %710 = vmatprep.subr.bf16.mxu0 0
      %711 = vmatpush1.bf16.msra.mxu0 %v690
      %712 = vmatprep.subr.bf16.mxu0 0
      %713 = vmatpush1.bf16.msra.mxu0 %v691
      %714 = vmatprep.subr.bf16.mxu0 0
      %715 = vmatpush1.bf16.msra.mxu0 %v692
      %716 = vmatprep.subr.bf16.mxu0 0
      %717 = vmatpush1.bf16.msra.mxu0 %v693
      %718 = vmatprep.subr.bf16.mxu0 0
      %719 = vmatpush1.bf16.msra.mxu0 0
      %720 = vmatprep.subr.bf16.mxu0 0
      %721 = vmatpush1.bf16.msra.mxu0 0
      %722 = vmatprep.subr.bf16.mxu0 0
      %723 = vmatpush1.bf16.msra.mxu0 0
      %724 = vmatprep.subr.bf16.mxu0 0
      %725 = vmatpush1.bf16.msra.mxu0 0
      %726 = vmatprep.subr.bf16.mxu0 0
      %727 = vmatpush1.bf16.msra.mxu0 0
      %728 = vmatprep.subr.bf16.mxu0 0
      %729 = vmatpush1.bf16.msra.mxu0 0
      %730 = vmatprep.subr.bf16.mxu0 0
      %731 = vmatpush1.bf16.msra.mxu0 0
      %732 = vmatprep.subr.bf16.mxu0 0
      %733 = vmatpush1.bf16.msra.mxu0 0
      %734 = vmatprep.mubr.bf16.mxu0 0
      %735 = vmatmul.mubr.bf16.gmra.mrb[0].mxu0 %v535
      %v736 = vpop.f32.mrb[0].mxu0
      %v737 = vadd.f32 %v652, %v736
      %v738 = vpop.f32.mrb[0].mxu0
      %v739 = vpop.f32.mrb[0].mxu0
      %v740 = vadd.f32 %v652, %v739
      %v741 = vpop.f32.mrb[0].mxu0
      %742 = vmatprep.mubr.bf16.mxu0 0
      %743 = vmatmul.mubr.bf16.gmra.mrb[0].mxu0 %v536
      %v744 = vpop.f32.mrb[0].mxu0
      %v745 = vadd.f32 %v652, %v744
      %v746 = vpop.f32.mrb[0].mxu0
      %v747 = vpop.f32.mrb[0].mxu0
      %v748 = vadd.f32 %v652, %v747
      %v749 = vpop.f32.mrb[0].mxu0
      %750 = vmatprep.mubr.bf16.mxu0 0
      %751 = vmatmul.mubr.bf16.gmra.mrb[0].mxu0 %v537
      %v752 = vpop.f32.mrb[0].mxu0
      %v753 = vadd.f32 %v652, %v752
      %v754 = vpop.f32.mrb[0].mxu0
      %v755 = vpop.f32.mrb[0].mxu0
      %v756 = vadd.f32 %v652, %v755
      %v757 = vpop.f32.mrb[0].mxu0
      %758 = vmatprep.mubr.bf16.mxu0 0
      %759 = vmatmul.mubr.bf16.gmra.mrb[0].mxu0 %v538
      %v760 = vpop.f32.mrb[0].mxu0
      %v761 = vadd.f32 %v652, %v760
      %v762 = vpop.f32.mrb[0].mxu0
      %v763 = vpop.f32.mrb[0].mxu0
      %v764 = vadd.f32 %v652, %v763
      %v765 = vpop.f32.mrb[0].mxu0
      %766 = vmatprep.mubr.bf16.mxu0 0
      %767 = vmatmul.mubr.bf16.gmra.mrb[0].mxu0 %v539
      %v768 = vpop.f32.mrb[0].mxu0
      %v769 = vadd.f32 %v652, %v768
      %v770 = vpop.f32.mrb[0].mxu0
      %v771 = vpop.f32.mrb[0].mxu0
      %v772 = vadd.f32 %v652, %v771
      %v773 = vpop.f32.mrb[0].mxu0
      %774 = vmatprep.mubr.bf16.mxu0 0
      %775 = vmatmul.mubr.bf16.gmra.mrb[0].mxu0 %v540
      %v776 = vpop.f32.mrb[0].mxu0
      %v777 = vadd.f32 %v652, %v776
      %v778 = vpop.f32.mrb[0].mxu0
      %v779 = vpop.f32.mrb[0].mxu0
      %v780 = vadd.f32 %v652, %v779
      %v781 = vpop.f32.mrb[0].mxu0
      %782 = vmatprep.mubr.bf16.mxu0 0
      %783 = vmatmul.mubr.bf16.gmra.mrb[0].mxu0 %v541
      %v784 = vpop.f32.mrb[0].mxu0
      %v785 = vadd.f32 %v652, %v784
      %v786 = vpop.f32.mrb[0].mxu0
      %v787 = vpop.f32.mrb[0].mxu0
      %v788 = vadd.f32 %v652, %v787
      %v789 = vpop.f32.mrb[0].mxu0
      %790 = vmatprep.mubr.bf16.mxu0 0
      %791 = vmatmul.mubr.bf16.gmra.mrb[0].mxu0 %v542
      %v792 = vpop.f32.mrb[0].mxu0
      %v793 = vadd.f32 %v652, %v792
      %v794 = vpop.f32.mrb[0].mxu0
      %v795 = vpop.f32.mrb[0].mxu0
      %v796 = vadd.f32 %v652, %v795
      %v797 = vpop.f32.mrb[0].mxu0
      %798 = vmatprep.mubr.bf16.mxu0 0
      %799 = vmatmul.mubr.bf16.gmra.mrb[0].mxu0 %v543
      %v800 = vpop.f32.mrb[0].mxu0
      %v801 = vadd.f32 %v652, %v800
      %v802 = vpop.f32.mrb[0].mxu0
      %v803 = vpop.f32.mrb[0].mxu0
      %v804 = vadd.f32 %v652, %v803
      %v805 = vpop.f32.mrb[0].mxu0
      %806 = vmatprep.mubr.bf16.mxu0 0
      %807 = vmatmul.mubr.bf16.gmra.mrb[0].mxu0 %v544
      %v808 = vpop.f32.mrb[0].mxu0
      %v809 = vadd.f32 %v652, %v808
      %v810 = vpop.f32.mrb[0].mxu0
      %v811 = vpop.f32.mrb[0].mxu0
      %v812 = vpop.f32.mrb[0].mxu0
      %813 = vdwg.mxu0
      %vm814 = vcmp.gt.f32.partialorder %v737, 0.0
      %vm815 = vcmp.gt.f32.partialorder %v740, 0.0
      %vm816 = vcmp.gt.f32.partialorder %v745, 0.0
      %vm817 = vcmp.gt.f32.partialorder %v748, 0.0
      %vm818 = vcmp.gt.f32.partialorder %v753, 0.0
      %vm819 = vcmp.gt.f32.partialorder %v756, 0.0
      %vm820 = vcmp.gt.f32.partialorder %v761, 0.0
      %vm821 = vcmp.gt.f32.partialorder %v764, 0.0
      %vm822 = vcmp.gt.f32.partialorder %v769, 0.0
      %vm823 = vcmp.gt.f32.partialorder %v772, 0.0
      %vm824 = vcmp.gt.f32.partialorder %v777, 0.0
      %vm825 = vcmp.gt.f32.partialorder %v780, 0.0
      %vm826 = vcmp.gt.f32.partialorder %v785, 0.0
      %vm827 = vcmp.gt.f32.partialorder %v788, 0.0
      %vm828 = vcmp.gt.f32.partialorder %v793, 0.0
      %vm829 = vcmp.gt.f32.partialorder %v796, 0.0
      %vm830 = vcmp.gt.f32.partialorder %v801, 0.0
      %vm831 = vcmp.gt.f32.partialorder %v804, 0.0
      %vm832 = vcmp.gt.f32.partialorder %v809, 0.0
      %v833 = vmul.f32 %v737, 0.01
      %v834 = vmul.f32 %v740, 0.01
      %v835 = vmul.f32 %v745, 0.01
      %v836 = vmul.f32 %v748, 0.01
      %v837 = vmul.f32 %v753, 0.01
      %v838 = vmul.f32 %v756, 0.01
      %v839 = vmul.f32 %v761, 0.01
      %v840 = vmul.f32 %v764, 0.01
      %v841 = vmul.f32 %v769, 0.01
      %v842 = vmul.f32 %v772, 0.01
      %v843 = vmul.f32 %v777, 0.01
      %v844 = vmul.f32 %v780, 0.01
      %v845 = vmul.f32 %v785, 0.01
      %v846 = vmul.f32 %v788, 0.01
      %v847 = vmul.f32 %v793, 0.01
      %v848 = vmul.f32 %v796, 0.01
      %v849 = vmul.f32 %v801, 0.01
      %v850 = vmul.f32 %v804, 0.01
      %v851 = vmul.f32 %v809, 0.01
      %v852 = vsel %vm814, %v737, %v833
      %v853 = vsel %vm815, %v740, %v834
      %v854 = vsel %vm816, %v745, %v835
      %v855 = vsel %vm817, %v748, %v836
      %v856 = vsel %vm818, %v753, %v837
      %v857 = vsel %vm819, %v756, %v838
      %v858 = vsel %vm820, %v761, %v839
      %v859 = vsel %vm821, %v764, %v840
      %v860 = vsel %vm822, %v769, %v841
      %v861 = vsel %vm823, %v772, %v842
      %v862 = vsel %vm824, %v777, %v843
      %v863 = vsel %vm825, %v780, %v844
      %v864 = vsel %vm826, %v785, %v845
      %v865 = vsel %vm827, %v788, %v846
      %v866 = vsel %vm828, %v793, %v847
      %v867 = vsel %vm829, %v796, %v848
      %v868 = vsel %vm830, %v801, %v849
      %v869 = vsel %vm831, %v804, %v850
      %v870 = vsel %vm832, %v809, %v851
      %p871 = scmp.ne.s32.totalorder %s18, 1
      // Predicated region
      $region41: #{fedmaldetect_forward.2} parent=39 // pred_check
        %p872 = pneg %p871
      $region42: #{fedmaldetect_forward.2} parent=39 // pred_check_branch
        %874 = sbr.rel (%p872) target = $region44
      $region43: #{fedmaldetect_forward.2} parent=39 // pred_region
        %v875 = vadd.f32 %v852, %v853
        %v876 = vadd.f32 %v875, %v854
        %v877 = vadd.f32 %v876, %v855
        %v878 = vadd.f32 %v877, %v856
        %v879 = vadd.f32 %v878, %v857
        %v880 = vadd.f32 %v879, %v858
        %v881 = vadd.f32 %v880, %v859
        %v882 = vadd.f32 %v881, %v860
        %v883 = vadd.f32 %v882, %v861
        %v884 = vadd.f32 %v883, %v862
        %v885 = vadd.f32 %v884, %v863
        %v886 = vadd.f32 %v885, %v864
        %v887 = vadd.f32 %v886, %v865
        %v888 = vadd.f32 %v887, %v866
        %v889 = vadd.f32 %v888, %v867
        %v890 = vadd.f32 %v889, %v868
        %v891 = vadd.f32 %v890, %v869
        %v892 = vadd.f32 %v891, %v870
        %v893 = vrot.slane %v892, 4
        %v894 = vadd.f32 %v892, %v893
        %v895 = vrot.slane %v894, 2
        %v896 = vadd.f32 %v894, %v895
        %v897 = vrot.slane %v896, 1
        %v898 = vadd.f32 %v896, %v897
        %899 = vst [vmem:[%s265] sm:$0x1] %v898
        %v900 = vmul.f32 %v852, %v852
        %v901 = vmul.f32 %v853, %v853
        %v902 = vmul.f32 %v854, %v854
        %v903 = vmul.f32 %v855, %v855
        %v904 = vmul.f32 %v856, %v856
        %v905 = vmul.f32 %v857, %v857
        %v906 = vmul.f32 %v858, %v858
        %v907 = vmul.f32 %v859, %v859
        %v908 = vmul.f32 %v860, %v860
        %v909 = vmul.f32 %v861, %v861
        %v910 = vmul.f32 %v862, %v862
        %v911 = vmul.f32 %v863, %v863
        %v912 = vmul.f32 %v864, %v864
        %v913 = vmul.f32 %v865, %v865
        %v914 = vmul.f32 %v866, %v866
        %v915 = vmul.f32 %v867, %v867
        %v916 = vmul.f32 %v868, %v868
        %v917 = vmul.f32 %v869, %v869
        %v918 = vmul.f32 %v870, %v870
        %v919 = vadd.f32 %v900, %v901
        %v920 = vadd.f32 %v919, %v902
        %v921 = vadd.f32 %v920, %v903
        %v922 = vadd.f32 %v921, %v904
        %v923 = vadd.f32 %v922, %v905
        %v924 = vadd.f32 %v923, %v906
        %v925 = vadd.f32 %v924, %v907
        %v926 = vadd.f32 %v925, %v908
        %v927 = vadd.f32 %v926, %v909
        %v928 = vadd.f32 %v927, %v910
        %v929 = vadd.f32 %v928, %v911
        %v930 = vadd.f32 %v929, %v912
        %v931 = vadd.f32 %v930, %v913
        %v932 = vadd.f32 %v931, %v914
        %v933 = vadd.f32 %v932, %v915
        %v934 = vadd.f32 %v933, %v916
        %v935 = vadd.f32 %v934, %v917
        %v936 = vadd.f32 %v935, %v918
        %v937 = vrot.slane %v936, 4
        %v938 = vadd.f32 %v936, %v937
        %v939 = vrot.slane %v938, 2
        %v940 = vadd.f32 %v938, %v939
        %v941 = vrot.slane %v940, 1
        %v942 = vadd.f32 %v940, %v941
        %943 = vst [vmem:[%s265 + $0x1] sm:$0x1] %v942
      $region44: #{fedmaldetect_forward.2} parent=39 // pred_fallthru
        _
      %p944 = scmp.eq.s32.totalorder %s18, 1
      // Predicated region
      $region45: #{fedmaldetect_forward.2} parent=39 // pred_check
        %p945 = pneg %p944
      $region46: #{fedmaldetect_forward.2} parent=39 // pred_check_branch
        %947 = sbr.rel (%p945) target = $region48
      $region47: #{fedmaldetect_forward.2} parent=39 // pred_region
        %v948 = vlaneseq
        %v949 = vshrl.u32 %v948, 7
        %v950 = vadd.s32 %v949, 8
        %v951 = vadd.s32 %v949, 16
        %v952 = vadd.s32 %v949, 24
        %v953 = vadd.s32 %v949, 32
        %v954 = vadd.s32 %v949, 40
        %v955 = vadd.s32 %v949, 48
        %v956 = vadd.s32 %v949, 56
        %v957 = vadd.s32 %v949, 64
        %v958 = vadd.s32 %v949, 72
        %v959 = vadd.s32 %v949, 80
        %v960 = vadd.s32 %v949, 88
        %v961 = vadd.s32 %v949, 96
        %v962 = vadd.s32 %v949, 104
        %v963 = vadd.s32 %v949, 112
        %v964 = vadd.s32 %v949, 120
        %v965 = vadd.s32 %v949, 128
        %v966 = vadd.s32 %v949, 136
        %v967 = vadd.s32 %v949, 144
        %s968 = smul.u32 %s18, 152
        %v969 = vstv %s968
        %v970 = vadd.s32 %v949, %v969
        %v971 = vadd.s32 %v950, %v969
        %v972 = vadd.s32 %v951, %v969
        %v973 = vadd.s32 %v952, %v969
        %v974 = vadd.s32 %v953, %v969
        %v975 = vadd.s32 %v954, %v969
        %v976 = vadd.s32 %v955, %v969
        %v977 = vadd.s32 %v956, %v969
        %v978 = vadd.s32 %v957, %v969
        %v979 = vadd.s32 %v958, %v969
        %v980 = vadd.s32 %v959, %v969
        %v981 = vadd.s32 %v960, %v969
        %v982 = vadd.s32 %v961, %v969
        %v983 = vadd.s32 %v962, %v969
        %v984 = vadd.s32 %v963, %v969
        %v985 = vadd.s32 %v964, %v969
        %v986 = vadd.s32 %v965, %v969
        %v987 = vadd.s32 %v966, %v969
        %v988 = vadd.s32 %v967, %v969
        %vm989 = vcmp.lt.s32.totalorder %v970, 300
        %vm990 = vcmp.lt.s32.totalorder %v971, 300
        %vm991 = vcmp.lt.s32.totalorder %v972, 300
        %vm992 = vcmp.lt.s32.totalorder %v973, 300
        %vm993 = vcmp.lt.s32.totalorder %v974, 300
        %vm994 = vcmp.lt.s32.totalorder %v975, 300
        %vm995 = vcmp.lt.s32.totalorder %v976, 300
        %vm996 = vcmp.lt.s32.totalorder %v977, 300
        %vm997 = vcmp.lt.s32.totalorder %v978, 300
        %vm998 = vcmp.lt.s32.totalorder %v979, 300
        %vm999 = vcmp.lt.s32.totalorder %v980, 300
        %vm1000 = vcmp.lt.s32.totalorder %v981, 300
        %vm1001 = vcmp.lt.s32.totalorder %v982, 300
        %vm1002 = vcmp.lt.s32.totalorder %v983, 300
        %vm1003 = vcmp.lt.s32.totalorder %v984, 300
        %vm1004 = vcmp.lt.s32.totalorder %v985, 300
        %vm1005 = vcmp.lt.s32.totalorder %v986, 300
        %vm1006 = vcmp.lt.s32.totalorder %v987, 300
        %vm1007 = vcmp.lt.s32.totalorder %v988, 300
        %v1008 = vsel %vm989, 1, 0
        %v1009 = vsel %vm990, 1, 0
        %v1010 = vsel %vm991, 1, 0
        %v1011 = vsel %vm992, 1, 0
        %v1012 = vsel %vm993, 1, 0
        %v1013 = vsel %vm994, 1, 0
        %v1014 = vsel %vm995, 1, 0
        %v1015 = vsel %vm996, 1, 0
        %v1016 = vsel %vm997, 1, 0
        %v1017 = vsel %vm998, 1, 0
        %v1018 = vsel %vm999, 1, 0
        %v1019 = vsel %vm1000, 1, 0
        %v1020 = vsel %vm1001, 1, 0
        %v1021 = vsel %vm1002, 1, 0
        %v1022 = vsel %vm1003, 1, 0
        %v1023 = vsel %vm1004, 1, 0
        %v1024 = vsel %vm1005, 1, 0
        %v1025 = vsel %vm1006, 1, 0
        %v1026 = vsel %vm1007, 1, 0
        %vm1027 = vcmp.eq.s32.totalorder %v1008, 1
        %vm1028 = vcmp.eq.s32.totalorder %v1009, 1
        %vm1029 = vcmp.eq.s32.totalorder %v1010, 1
        %vm1030 = vcmp.eq.s32.totalorder %v1011, 1
        %vm1031 = vcmp.eq.s32.totalorder %v1012, 1
        %vm1032 = vcmp.eq.s32.totalorder %v1013, 1
        %vm1033 = vcmp.eq.s32.totalorder %v1014, 1
        %vm1034 = vcmp.eq.s32.totalorder %v1015, 1
        %vm1035 = vcmp.eq.s32.totalorder %v1016, 1
        %vm1036 = vcmp.eq.s32.totalorder %v1017, 1
        %vm1037 = vcmp.eq.s32.totalorder %v1018, 1
        %vm1038 = vcmp.eq.s32.totalorder %v1019, 1
        %vm1039 = vcmp.eq.s32.totalorder %v1020, 1
        %vm1040 = vcmp.eq.s32.totalorder %v1021, 1
        %vm1041 = vcmp.eq.s32.totalorder %v1022, 1
        %vm1042 = vcmp.eq.s32.totalorder %v1023, 1
        %vm1043 = vcmp.eq.s32.totalorder %v1024, 1
        %vm1044 = vcmp.eq.s32.totalorder %v1025, 1
        %vm1045 = vcmp.eq.s32.totalorder %v1026, 1
        %v1046 = vsel %vm1027, %v852, 0.0
        %v1047 = vsel %vm1028, %v853, 0.0
        %v1048 = vsel %vm1029, %v854, 0.0
        %v1049 = vsel %vm1030, %v855, 0.0
        %v1050 = vsel %vm1031, %v856, 0.0
        %v1051 = vsel %vm1032, %v857, 0.0
        %v1052 = vsel %vm1033, %v858, 0.0
        %v1053 = vsel %vm1034, %v859, 0.0
        %v1054 = vsel %vm1035, %v860, 0.0
        %v1055 = vsel %vm1036, %v861, 0.0
        %v1056 = vsel %vm1037, %v862, 0.0
        %v1057 = vsel %vm1038, %v863, 0.0
        %v1058 = vsel %vm1039, %v864, 0.0
        %v1059 = vsel %vm1040, %v865, 0.0
        %v1060 = vsel %vm1041, %v866, 0.0
        %v1061 = vsel %vm1042, %v867, 0.0
        %v1062 = vsel %vm1043, %v868, 0.0
        %v1063 = vsel %vm1044, %v869, 0.0
        %v1064 = vsel %vm1045, %v870, 0.0
        %v1065 = vadd.f32 %v1046, %v1047
        %v1066 = vadd.f32 %v1065, %v1048
        %v1067 = vadd.f32 %v1066, %v1049
        %v1068 = vadd.f32 %v1067, %v1050
        %v1069 = vadd.f32 %v1068, %v1051
        %v1070 = vadd.f32 %v1069, %v1052
        %v1071 = vadd.f32 %v1070, %v1053
        %v1072 = vadd.f32 %v1071, %v1054
        %v1073 = vadd.f32 %v1072, %v1055
        %v1074 = vadd.f32 %v1073, %v1056
        %v1075 = vadd.f32 %v1074, %v1057
        %v1076 = vadd.f32 %v1075, %v1058
        %v1077 = vadd.f32 %v1076, %v1059
        %v1078 = vadd.f32 %v1077, %v1060
        %v1079 = vadd.f32 %v1078, %v1061
        %v1080 = vadd.f32 %v1079, %v1062
        %v1081 = vadd.f32 %v1080, %v1063
        %v1082 = vadd.f32 %v1081, %v1064
        %v1083 = vrot.slane %v1082, 4
        %v1084 = vadd.f32 %v1082, %v1083
        %v1085 = vrot.slane %v1084, 2
        %v1086 = vadd.f32 %v1084, %v1085
        %v1087 = vrot.slane %v1086, 1
        %v1088 = vadd.f32 %v1086, %v1087
        %1089 = vst [vmem:[%s265] sm:$0x1] %v1088
        %v1090 = vmul.f32 %v1046, %v1046
        %v1091 = vmul.f32 %v1047, %v1047
        %v1092 = vmul.f32 %v1048, %v1048
        %v1093 = vmul.f32 %v1049, %v1049
        %v1094 = vmul.f32 %v1050, %v1050
        %v1095 = vmul.f32 %v1051, %v1051
        %v1096 = vmul.f32 %v1052, %v1052
        %v1097 = vmul.f32 %v1053, %v1053
        %v1098 = vmul.f32 %v1054, %v1054
        %v1099 = vmul.f32 %v1055, %v1055
        %v1100 = vmul.f32 %v1056, %v1056
        %v1101 = vmul.f32 %v1057, %v1057
        %v1102 = vmul.f32 %v1058, %v1058
        %v1103 = vmul.f32 %v1059, %v1059
        %v1104 = vmul.f32 %v1060, %v1060
        %v1105 = vmul.f32 %v1061, %v1061
        %v1106 = vmul.f32 %v1062, %v1062
        %v1107 = vmul.f32 %v1063, %v1063
        %v1108 = vmul.f32 %v1064, %v1064
        %v1109 = vadd.f32 %v1090, %v1091
        %v1110 = vadd.f32 %v1109, %v1092
        %v1111 = vadd.f32 %v1110, %v1093
        %v1112 = vadd.f32 %v1111, %v1094
        %v1113 = vadd.f32 %v1112, %v1095
        %v1114 = vadd.f32 %v1113, %v1096
        %v1115 = vadd.f32 %v1114, %v1097
        %v1116 = vadd.f32 %v1115, %v1098
        %v1117 = vadd.f32 %v1116, %v1099
        %v1118 = vadd.f32 %v1117, %v1100
        %v1119 = vadd.f32 %v1118, %v1101
        %v1120 = vadd.f32 %v1119, %v1102
        %v1121 = vadd.f32 %v1120, %v1103
        %v1122 = vadd.f32 %v1121, %v1104
        %v1123 = vadd.f32 %v1122, %v1105
        %v1124 = vadd.f32 %v1123, %v1106
        %v1125 = vadd.f32 %v1124, %v1107
        %v1126 = vadd.f32 %v1125, %v1108
        %v1127 = vrot.slane %v1126, 4
        %v1128 = vadd.f32 %v1126, %v1127
        %v1129 = vrot.slane %v1128, 2
        %v1130 = vadd.f32 %v1128, %v1129
        %v1131 = vrot.slane %v1130, 1
        %v1132 = vadd.f32 %v1130, %v1131
        %1133 = vst [vmem:[%s265 + $0x1] sm:$0x1] %v1132
      $region48: #{fedmaldetect_forward.2} parent=39 // pred_fallthru
        _
      %s1134 = smul.u32 19, %s18
      %p1135 = scmp.lt.s32.totalorder %s1134, 37
      %s1136 = scalar_select %p1135, %s1134, 37
      %s1137 = smul.addr %s1136, 4
      %s1138 = scalar_lea.vmem %s5, %s1137
      %p1139 = scmp.lt.s32.totalorder %s18, 1
      %s1140 = scalar_select %p1139, %s18, 1
      %s1141 = smul.addr %s1140, 8
      %s1142 = scalar_lea.vmem %s6, %s1141
      // Predicated region
      $region49: #{fedmaldetect_forward.2} parent=39 // pred_check
        %p1143 = pneg %p146
      $region50: #{fedmaldetect_forward.2} parent=39 // pred_check_branch
        %1145 = sbr.rel (%p1143) target = $region52
      $region51: #{fedmaldetect_forward.2} parent=39 // pred_region
        %s1146 = smul.u32 19, %s18
      $region52: #{fedmaldetect_forward.2} parent=39 // pred_fallthru
        _
      // Predicated region
      $region53: #{fedmaldetect_forward.2} parent=39 // pred_check
        %p1147 = pneg %p172
      $region54: #{fedmaldetect_forward.2} parent=39 // pred_check_branch
        %1149 = sbr.rel (%p1147) target = $region56
      $region55: #{fedmaldetect_forward.2} parent=39 // pred_region
        _
      $region56: #{fedmaldetect_forward.2} parent=39 // pred_fallthru
        _
    $region40: #{fedmaldetect_forward.2} parent=5 // pred_fallthru
      _
    %p1150 = scmp.le.s32.totalorder 2, %s13
    // Predicated region
    $region57: #{fedmaldetect_forward.2} parent=5 // pred_check
      %p1151 = pneg %p1150
    $region58: #{fedmaldetect_forward.2} parent=5 // pred_check_branch
      %1153 = sbr.rel (%p1151) target = $region60
    $region59: #{fedmaldetect_forward.2} parent=5 // pred_region
      %s1154 = ssub.s32 %s13, 2
      // Predicated region
      $region61: #{fedmaldetect_forward.2} parent=59 // pred_check
        %p1155 = pneg %p152
      $region62: #{fedmaldetect_forward.2} parent=59 // pred_check_branch
        %1157 = sbr.rel (%p1155) target = $region64
      $region63: #{fedmaldetect_forward.2} parent=59 // pred_region
        %s1158 = smul.u32 19, %s19
        %p1159 = scmp.lt.s32.totalorder %s1158, 37
        %s1160 = scalar_select %p1159, %s1158, 37
        %s1161 = smul.addr %s1160, 4
        %s1162 = scalar_lea.vmem %s5, %s1161
      $region64: #{fedmaldetect_forward.2} parent=59 // pred_fallthru
        _
      // Predicated region
      $region65: #{fedmaldetect_forward.2} parent=59 // pred_check
        %p1163 = pneg %p178
      $region66: #{fedmaldetect_forward.2} parent=59 // pred_check_branch
        %1165 = sbr.rel (%p1163) target = $region68
      $region67: #{fedmaldetect_forward.2} parent=59 // pred_region
        %p1166 = scmp.lt.s32.totalorder %s19, 1
        %s1167 = scalar_select %p1166, %s19, 1
        %s1168 = smul.addr %s1167, 8
        %s1169 = scalar_lea.vmem %s6, %s1168
      $region68: #{fedmaldetect_forward.2} parent=59 // pred_fallthru
        _
    $region60: #{fedmaldetect_forward.2} parent=5 // pred_fallthru
      _
  $region6: #{fedmaldetect_forward.2} parent=0 // loop_footer
    %s17 = sadd.s32 1, %s13
  $region7: #{fedmaldetect_forward.2} parent=0 // loop_footer_branch
    %12 = sbr.rel target = $region3
  $region8: #{fedmaldetect_forward.2} parent=0 // loop_exit
    _

// kernel: fedmaldetect_forward.3
$region0: #{fedmaldetect_forward.3}
  #allocation0 [shape = 'u32[]', space=smem, size = 0x4, offset = 0x4, fixed_abs, tag = 'smem constant byte address 0x4 - core index']
  #allocation1 [shape = 'u32[144,128]{1,0:T(1,128)}', space=vmem, size = 0x12000, scoped, tag = 'internal scratch']
  %s0 = inlined_call_operand.vmem [shape: bf16[300,128], index: 0, kind: input, shape index: {}]
  %s1 = inlined_call_operand.vmem [shape: bf16[128,128], index: 1, kind: input, shape index: {}]
  %s2 = inlined_call_operand.vmem [shape: f32[1,128], index: 2, kind: input, shape index: {}]
  %s3 = inlined_call_operand.vmem [shape: f32[1,128], index: 3, kind: input, shape index: {}]
  %s4 = inlined_call_operand.vmem [shape: f32[1,128], index: 4, kind: input, shape index: {}]
  %s5 = inlined_call_operand.vmem [shape: bf16[128,128], index: 5, kind: input, shape index: {}]
  %s6 = inlined_call_operand.vmem [shape: f32[1,128], index: 6, kind: input, shape index: {}]
  %s7 = inlined_call_operand.vmem [shape: bf16[128,128], index: 7, kind: input, shape index: {}]
  %s8 = inlined_call_operand.vmem [shape: f32[1,128], index: 8, kind: input, shape index: {}]
  %s9 = inlined_call_operand.vmem [shape: bf16[300,128], index: 9, kind: output, shape index: {}]
  %s10 = sld [smem:[#allocation0]]
  $region69: #{fedmaldetect_forward.3} parent=0
    _
  %s12 = ssub.s32 1, %s10
  %s13 = scalar_select 0, %s12, %s10
  loop: start=0, step=1, limit=4
  $region2: #{fedmaldetect_forward.3} parent=0 // loop_pre_header
    _
  $region3: #{fedmaldetect_forward.3} parent=0 // loop_header
    %s15 = sphi 0, %s19
    %p16 = scmp.ge.s32.totalorder %s15, 4
    %s25 = sphi 0, %s27
    %s28 = sphi 0, %s25
    %s29 = sphi 0, %s28
    %s45 = sphi 0, %s29
    %s49 = sphi 0, %s49
    %s51 = sphi 0, %s49
    %s52 = sphi 0, %s51
    %s66 = sphi 0, %s52
    %s70 = sphi 0, %s70
    %s72 = sphi 0, %s70
    %s73 = sphi 0, %s72
    %s87 = sphi 0, %s73
    %s91 = sphi 0, %s91
    %s93 = sphi 0, %s91
    %s94 = sphi 0, %s93
    %s108 = sphi 0, %s94
    %s112 = sphi 0, %s112
    %s114 = sphi 0, %s112
    %s115 = sphi 0, %s114
    %s129 = sphi 0, %s115
    %s133 = sphi 0, %s133
    %s135 = sphi 0, %s133
    %s136 = sphi 0, %s135
    %s150 = sphi 0, %s136
    %s154 = sphi 0, %s154
    %s156 = sphi 0, %s154
    %s157 = sphi 0, %s156
    %s171 = sphi 0, %s157
    %s175 = sphi 0, %s175
    %s177 = sphi 0, %s175
    %s178 = sphi 0, %s177
    %s192 = sphi 0, %s178
    %s196 = sphi 0, %s196
    %s198 = sphi 0, %s196
    %s199 = sphi 0, %s198
    %s213 = sphi 0, %s199
    %s219 = sphi 0, %s221
    %s222 = sphi 0, %s219
    %s223 = sphi 0, %s222
    %s239 = sphi 0, %s223
  $region4: #{fedmaldetect_forward.3} parent=0 // loop_header_branch
    %18 = sbr.rel (%p16) target = $region8
  $region5: #{fedmaldetect_forward.3} parent=0 // loop_body
    %s20 = ssub.s32 %s15, 1
    %s21 = ssub.s32 %s15, 2
    %s22 = sadd.s32 %s15, 1
    %s23 = ssub.s32 %s15, %s22
    %p24 = scmp.eq.s32.totalorder %s23, 0
    %s26 = sadd.s32 %s25, 1
    %s27 = scalar_select %p24, %s25, %s26
    %p30 = pneg %p24
    %p31 = scmp.eq.s32.totalorder %s15, 1
    %p32 = por %p30, %p31
    %p33 = scmp.ne.s32.totalorder %s25, %s28
    %p34 = scmp.eq.s32.totalorder %s15, 0
    %p35 = por %p33, %p34
    %p36 = scmp.ne.s32.totalorder %s25, %s28
    %p37 = scmp.eq.s32.totalorder %s20, 1
    %p38 = por %p36, %p37
    %p39 = scmp.ne.s32.totalorder %s28, %s29
    %p40 = scmp.eq.s32.totalorder %s20, 0
    %p41 = por %p39, %p40
    %p42 = scmp.ne.s32.totalorder %s28, %s29
    %p43 = scmp.eq.s32.totalorder %s21, 1
    %p44 = por %p42, %p43
    %p46 = scmp.ne.s32.totalorder %s29, %s45
    %p47 = scmp.eq.s32.totalorder %s21, 0
    %p48 = por %p46, %p47
    %s50 = sadd.s32 %s49, 1
    %p53 = scmp.eq.s32.totalorder %s15, 1
    %p54 = scmp.ne.s32.totalorder %s49, %s51
    %p55 = scmp.eq.s32.totalorder %s15, 0
    %p56 = por %p54, %p55
    %p57 = scmp.ne.s32.totalorder %s49, %s51
    %p58 = scmp.eq.s32.totalorder %s20, 1
    %p59 = por %p57, %p58
    %p60 = scmp.ne.s32.totalorder %s51, %s52
    %p61 = scmp.eq.s32.totalorder %s20, 0
    %p62 = por %p60, %p61
    %p63 = scmp.ne.s32.totalorder %s51, %s52
    %p64 = scmp.eq.s32.totalorder %s21, 1
    %p65 = por %p63, %p64
    %p67 = scmp.ne.s32.totalorder %s52, %s66
    %p68 = scmp.eq.s32.totalorder %s21, 0
    %p69 = por %p67, %p68
    %s71 = sadd.s32 %s70, 1
    %p74 = scmp.eq.s32.totalorder %s15, 1
    %p75 = scmp.ne.s32.totalorder %s70, %s72
    %p76 = scmp.eq.s32.totalorder %s15, 0
    %p77 = por %p75, %p76
    %p78 = scmp.ne.s32.totalorder %s70, %s72
    %p79 = scmp.eq.s32.totalorder %s20, 1
    %p80 = por %p78, %p79
    %p81 = scmp.ne.s32.totalorder %s72, %s73
    %p82 = scmp.eq.s32.totalorder %s20, 0
    %p83 = por %p81, %p82
    %p84 = scmp.ne.s32.totalorder %s72, %s73
    %p85 = scmp.eq.s32.totalorder %s21, 1
    %p86 = por %p84, %p85
    %p88 = scmp.ne.s32.totalorder %s73, %s87
    %p89 = scmp.eq.s32.totalorder %s21, 0
    %p90 = por %p88, %p89
    %s92 = sadd.s32 %s91, 1
    %p95 = scmp.eq.s32.totalorder %s15, 1
    %p96 = scmp.ne.s32.totalorder %s91, %s93
    %p97 = scmp.eq.s32.totalorder %s15, 0
    %p98 = por %p96, %p97
    %p99 = scmp.ne.s32.totalorder %s91, %s93
    %p100 = scmp.eq.s32.totalorder %s20, 1
    %p101 = por %p99, %p100
    %p102 = scmp.ne.s32.totalorder %s93, %s94
    %p103 = scmp.eq.s32.totalorder %s20, 0
    %p104 = por %p102, %p103
    %p105 = scmp.ne.s32.totalorder %s93, %s94
    %p106 = scmp.eq.s32.totalorder %s21, 1
    %p107 = por %p105, %p106
    %p109 = scmp.ne.s32.totalorder %s94, %s108
    %p110 = scmp.eq.s32.totalorder %s21, 0
    %p111 = por %p109, %p110
    %s113 = sadd.s32 %s112, 1
    %p116 = scmp.eq.s32.totalorder %s15, 1
    %p117 = scmp.ne.s32.totalorder %s112, %s114
    %p118 = scmp.eq.s32.totalorder %s15, 0
    %p119 = por %p117, %p118
    %p120 = scmp.ne.s32.totalorder %s112, %s114
    %p121 = scmp.eq.s32.totalorder %s20, 1
    %p122 = por %p120, %p121
    %p123 = scmp.ne.s32.totalorder %s114, %s115
    %p124 = scmp.eq.s32.totalorder %s20, 0
    %p125 = por %p123, %p124
    %p126 = scmp.ne.s32.totalorder %s114, %s115
    %p127 = scmp.eq.s32.totalorder %s21, 1
    %p128 = por %p126, %p127
    %p130 = scmp.ne.s32.totalorder %s115, %s129
    %p131 = scmp.eq.s32.totalorder %s21, 0
    %p132 = por %p130, %p131
    %s134 = sadd.s32 %s133, 1
    %p137 = scmp.eq.s32.totalorder %s15, 1
    %p138 = scmp.ne.s32.totalorder %s133, %s135
    %p139 = scmp.eq.s32.totalorder %s15, 0
    %p140 = por %p138, %p139
    %p141 = scmp.ne.s32.totalorder %s133, %s135
    %p142 = scmp.eq.s32.totalorder %s20, 1
    %p143 = por %p141, %p142
    %p144 = scmp.ne.s32.totalorder %s135, %s136
    %p145 = scmp.eq.s32.totalorder %s20, 0
    %p146 = por %p144, %p145
    %p147 = scmp.ne.s32.totalorder %s135, %s136
    %p148 = scmp.eq.s32.totalorder %s21, 1
    %p149 = por %p147, %p148
    %p151 = scmp.ne.s32.totalorder %s136, %s150
    %p152 = scmp.eq.s32.totalorder %s21, 0
    %p153 = por %p151, %p152
    %s155 = sadd.s32 %s154, 1
    %p158 = scmp.eq.s32.totalorder %s15, 1
    %p159 = scmp.ne.s32.totalorder %s154, %s156
    %p160 = scmp.eq.s32.totalorder %s15, 0
    %p161 = por %p159, %p160
    %p162 = scmp.ne.s32.totalorder %s154, %s156
    %p163 = scmp.eq.s32.totalorder %s20, 1
    %p164 = por %p162, %p163
    %p165 = scmp.ne.s32.totalorder %s156, %s157
    %p166 = scmp.eq.s32.totalorder %s20, 0
    %p167 = por %p165, %p166
    %p168 = scmp.ne.s32.totalorder %s156, %s157
    %p169 = scmp.eq.s32.totalorder %s21, 1
    %p170 = por %p168, %p169
    %p172 = scmp.ne.s32.totalorder %s157, %s171
    %p173 = scmp.eq.s32.totalorder %s21, 0
    %p174 = por %p172, %p173
    %s176 = sadd.s32 %s175, 1
    %p179 = scmp.eq.s32.totalorder %s15, 1
    %p180 = scmp.ne.s32.totalorder %s175, %s177
    %p181 = scmp.eq.s32.totalorder %s15, 0
    %p182 = por %p180, %p181
    %p183 = scmp.ne.s32.totalorder %s175, %s177
    %p184 = scmp.eq.s32.totalorder %s20, 1
    %p185 = por %p183, %p184
    %p186 = scmp.ne.s32.totalorder %s177, %s178
    %p187 = scmp.eq.s32.totalorder %s20, 0
    %p188 = por %p186, %p187
    %p189 = scmp.ne.s32.totalorder %s177, %s178
    %p190 = scmp.eq.s32.totalorder %s21, 1
    %p191 = por %p189, %p190
    %p193 = scmp.ne.s32.totalorder %s178, %s192
    %p194 = scmp.eq.s32.totalorder %s21, 0
    %p195 = por %p193, %p194
    %s197 = sadd.s32 %s196, 1
    %p200 = scmp.eq.s32.totalorder %s15, 1
    %p201 = scmp.ne.s32.totalorder %s196, %s198
    %p202 = scmp.eq.s32.totalorder %s15, 0
    %p203 = por %p201, %p202
    %p204 = scmp.ne.s32.totalorder %s196, %s198
    %p205 = scmp.eq.s32.totalorder %s20, 1
    %p206 = por %p204, %p205
    %p207 = scmp.ne.s32.totalorder %s198, %s199
    %p208 = scmp.eq.s32.totalorder %s20, 0
    %p209 = por %p207, %p208
    %p210 = scmp.ne.s32.totalorder %s198, %s199
    %p211 = scmp.eq.s32.totalorder %s21, 1
    %p212 = por %p210, %p211
    %p214 = scmp.ne.s32.totalorder %s199, %s213
    %p215 = scmp.eq.s32.totalorder %s21, 0
    %p216 = por %p214, %p215
    %s217 = ssub.s32 %s15, %s22
    %p218 = scmp.eq.s32.totalorder %s217, 0
    %s220 = sadd.s32 %s219, 1
    %s221 = scalar_select %p218, %s219, %s220
    %p224 = pneg %p218
    %p225 = scmp.eq.s32.totalorder %s15, 1
    %p226 = por %p224, %p225
    %p227 = scmp.ne.s32.totalorder %s219, %s222
    %p228 = scmp.eq.s32.totalorder %s15, 0
    %p229 = por %p227, %p228
    %p230 = scmp.ne.s32.totalorder %s219, %s222
    %p231 = scmp.eq.s32.totalorder %s20, 1
    %p232 = por %p230, %p231
    %p233 = scmp.ne.s32.totalorder %s222, %s223
    %p234 = scmp.eq.s32.totalorder %s20, 0
    %p235 = por %p233, %p234
    %p236 = scmp.ne.s32.totalorder %s222, %s223
    %p237 = scmp.eq.s32.totalorder %s21, 1
    %p238 = por %p236, %p237
    %p240 = scmp.ne.s32.totalorder %s223, %s239
    %p241 = scmp.eq.s32.totalorder %s21, 0
    %p242 = por %p240, %p241
    %p243 = scmp.le.s32.totalorder 1, %s15
    %p244 = scmp.lt.s32.totalorder %s15, 3
    %p245 = pnand %p243, %p244
    %p246 = pneg %p245
    // Predicated region
    $region9: #{fedmaldetect_forward.3} parent=5 // pred_check
      _
    $region10: #{fedmaldetect_forward.3} parent=5 // pred_check_branch
      %248 = sbr.rel (%p245) target = $region12
    $region11: #{fedmaldetect_forward.3} parent=5 // pred_region
      %s249 = ssub.s32 %s15, 1
      // Predicated region
      $region13: #{fedmaldetect_forward.3} parent=11 // pred_check
        %p250 = pneg %p62
      $region14: #{fedmaldetect_forward.3} parent=11 // pred_check_branch
        %252 = sbr.rel (%p250) target = $region16
      $region15: #{fedmaldetect_forward.3} parent=11 // pred_region
        _
      $region16: #{fedmaldetect_forward.3} parent=11 // pred_fallthru
        _
      // Predicated region
      $region17: #{fedmaldetect_forward.3} parent=11 // pred_check
        %p253 = pneg %p83
      $region18: #{fedmaldetect_forward.3} parent=11 // pred_check_branch
        %255 = sbr.rel (%p253) target = $region20
      $region19: #{fedmaldetect_forward.3} parent=11 // pred_region
        _
      $region20: #{fedmaldetect_forward.3} parent=11 // pred_fallthru
        _
      // Predicated region
      $region21: #{fedmaldetect_forward.3} parent=11 // pred_check
        %p256 = pneg %p104
      $region22: #{fedmaldetect_forward.3} parent=11 // pred_check_branch
        %258 = sbr.rel (%p256) target = $region24
      $region23: #{fedmaldetect_forward.3} parent=11 // pred_region
        _
      $region24: #{fedmaldetect_forward.3} parent=11 // pred_fallthru
        _
      // Predicated region
      $region25: #{fedmaldetect_forward.3} parent=11 // pred_check
        %p259 = pneg %p125
      $region26: #{fedmaldetect_forward.3} parent=11 // pred_check_branch
        %261 = sbr.rel (%p259) target = $region28
      $region27: #{fedmaldetect_forward.3} parent=11 // pred_region
        _
      $region28: #{fedmaldetect_forward.3} parent=11 // pred_fallthru
        _
      // Predicated region
      $region29: #{fedmaldetect_forward.3} parent=11 // pred_check
        %p262 = pneg %p146
      $region30: #{fedmaldetect_forward.3} parent=11 // pred_check_branch
        %264 = sbr.rel (%p262) target = $region32
      $region31: #{fedmaldetect_forward.3} parent=11 // pred_region
        _
      $region32: #{fedmaldetect_forward.3} parent=11 // pred_fallthru
        _
      // Predicated region
      $region33: #{fedmaldetect_forward.3} parent=11 // pred_check
        %p265 = pneg %p167
      $region34: #{fedmaldetect_forward.3} parent=11 // pred_check_branch
        %267 = sbr.rel (%p265) target = $region36
      $region35: #{fedmaldetect_forward.3} parent=11 // pred_region
        _
      $region36: #{fedmaldetect_forward.3} parent=11 // pred_fallthru
        _
      // Predicated region
      $region37: #{fedmaldetect_forward.3} parent=11 // pred_check
        %p268 = pneg %p188
      $region38: #{fedmaldetect_forward.3} parent=11 // pred_check_branch
        %270 = sbr.rel (%p268) target = $region40
      $region39: #{fedmaldetect_forward.3} parent=11 // pred_region
        _
      $region40: #{fedmaldetect_forward.3} parent=11 // pred_fallthru
        _
      // Predicated region
      $region41: #{fedmaldetect_forward.3} parent=11 // pred_check
        %p271 = pneg %p209
      $region42: #{fedmaldetect_forward.3} parent=11 // pred_check_branch
        %273 = sbr.rel (%p271) target = $region44
      $region43: #{fedmaldetect_forward.3} parent=11 // pred_region
        _
      $region44: #{fedmaldetect_forward.3} parent=11 // pred_fallthru
        _
    $region12: #{fedmaldetect_forward.3} parent=5 // pred_fallthru
      _
    %p274 = scmp.lt.s32.totalorder %s15, 2
    // Predicated region
    $region45: #{fedmaldetect_forward.3} parent=5 // pred_check
      %p275 = pneg %p274
    $region46: #{fedmaldetect_forward.3} parent=5 // pred_check_branch
      %277 = sbr.rel (%p275) target = $region48
    $region47: #{fedmaldetect_forward.3} parent=5 // pred_region
      // Predicated region
      $region49: #{fedmaldetect_forward.3} parent=47 // pred_check
        %p278 = pneg %p35
      $region50: #{fedmaldetect_forward.3} parent=47 // pred_check_branch
        %280 = sbr.rel (%p278) target = $region52
      $region51: #{fedmaldetect_forward.3} parent=47 // pred_region
        %s281 = smul.u32 19, %s15
        %p282 = scmp.lt.s32.totalorder %s281, 37
        %s283 = scalar_select %p282, %s281, 37
        %s284 = smul.addr %s283, 4
        %s285 = scalar_lea.vmem %s0, %s284
        %s286 = smul.u32 19, %s15
      $region52: #{fedmaldetect_forward.3} parent=47 // pred_fallthru
        _
    $region48: #{fedmaldetect_forward.3} parent=5 // pred_fallthru
      _
    %p287 = scmp.le.s32.totalorder 1, %s15
    %p288 = scmp.lt.s32.totalorder %s15, 3
    %p289 = pnand %p287, %p288
    %p290 = pneg %p289
    // Predicated region
    $region53: #{fedmaldetect_forward.3} parent=5 // pred_check
      _
    $region54: #{fedmaldetect_forward.3} parent=5 // pred_check_branch
      %292 = sbr.rel (%p289) target = $region56
    $region55: #{fedmaldetect_forward.3} parent=5 // pred_region
      %s293 = ssub.s32 %s15, 1
      %s294 = smul.u32 19, %s20
      %p295 = scmp.lt.s32.totalorder %s294, 37
      %s296 = scalar_select %p295, %s294, 37
      %s297 = smul.addr %s296, 4
      %s298 = scalar_lea.vmem %s0, %s297
      %p299 = pneg %p41
      %p300 = pneg %p38
      %p301 = pneg %p62
      %p302 = pneg %p59
      %p303 = pneg %p83
      %p304 = pneg %p80
      %p305 = pneg %p104
      %p306 = pneg %p101
      %p307 = pneg %p125
      %p308 = pneg %p122
      %p309 = pneg %p146
      %p310 = pneg %p143
      %p311 = pneg %p167
      %p312 = pneg %p164
      %p313 = pneg %p188
      %p314 = pneg %p185
      %p315 = pneg %p209
      %p316 = pneg %p206
      %p317 = pneg %p235
      %p318 = pneg %p232
      %s319 = smul.u32 19, %s20
      %p320 = scmp.lt.s32.totalorder %s319, 37
      %s321 = scalar_select %p320, %s319, 37
      %s322 = smul.addr %s321, 4
      %s323 = scalar_lea.vmem %s9, %s322
      %s324 = smul.u32 19, %s20
      %p325 = scmp.lt.s32.totalorder %s324, 37
      %s326 = scalar_select %p325, %s324, 37
      %s327 = smul.addr %s326, 4
      %s328 = scalar_lea.vmem %s0, %s327
      %s329 = smul.u32 19, %s20
      %s330 = smul.u32 19, %s20
      %p331 = scmp.lt.s32.totalorder %s330, 37
      %s332 = scalar_select %p331, %s330, 37
      %s333 = smul.addr %s332, 4
      %s334 = scalar_lea.vmem %s9, %s333
      %s335 = smul.u32 19, %s20
      %v337 = vld [vmem:[%s328] sm:$0xf]
      %v338 = vld [vmem:[%s328 + $0x4] sm:$0xf]
      %v339 = vld [vmem:[%s328 + $0x8] sm:$0xf]
      %v340 = vld [vmem:[%s328 + $0xc] sm:$0xf]
      %v341 = vld [vmem:[%s328 + $0x10] sm:$0xf]
      %v342 = vld [vmem:[%s328 + $0x14] sm:$0xf]
      %v343 = vld [vmem:[%s328 + $0x18] sm:$0xf]
      %v344 = vld [vmem:[%s328 + $0x1c] sm:$0xf]
      %v345 = vld [vmem:[%s328 + $0x20] sm:$0xf]
      %v346 = vld [vmem:[%s328 + $0x24] sm:$0xf]
      %v347 = vld [vmem:[%s328 + $0x28] sm:$0xf]
      %v348 = vld [vmem:[%s328 + $0x2c] sm:$0xf]
      %v349 = vld [vmem:[%s328 + $0x30] sm:$0xf]
      %v350 = vld [vmem:[%s328 + $0x34] sm:$0xf]
      %v351 = vld [vmem:[%s328 + $0x38] sm:$0xf]
      %v352 = vld [vmem:[%s328 + $0x3c] sm:$0xf]
      %v353 = vld [vmem:[%s328 + $0x40] sm:$0xf]
      %v354 = vld [vmem:[%s328 + $0x44] sm:$0xf]
      %v355 = vld [vmem:[%s328 + $0x48] sm:$0xf]
      %v356 = vld [vmem:[%s1] sm:$0xf]
      %v357 = vld [vmem:[%s1 + $0x4] sm:$0xf]
      %v358 = vld [vmem:[%s1 + $0x8] sm:$0xf]
      %v359 = vld [vmem:[%s1 + $0xc] sm:$0xf]
      %v360 = vld [vmem:[%s1 + $0x10] sm:$0xf]
      %v361 = vld [vmem:[%s1 + $0x14] sm:$0xf]
      %v362 = vld [vmem:[%s1 + $0x18] sm:$0xf]
      %v363 = vld [vmem:[%s1 + $0x1c] sm:$0xf]
      %v364 = vld [vmem:[%s1 + $0x20] sm:$0xf]
      %v365 = vld [vmem:[%s1 + $0x24] sm:$0xf]
      %v366 = vld [vmem:[%s1 + $0x28] sm:$0xf]
      %v367 = vld [vmem:[%s1 + $0x2c] sm:$0xf]
      %v368 = vld [vmem:[%s1 + $0x30] sm:$0xf]
      %v369 = vld [vmem:[%s1 + $0x34] sm:$0xf]
      %v370 = vld [vmem:[%s1 + $0x38] sm:$0xf]
      %v371 = vld [vmem:[%s1 + $0x3c] sm:$0xf]
      %v372 = vld [vmem:[%s2] sm:$0x1]
      %v374 = vlaneseq
      %v375 = vshrl.u32 %v374, 7
      %v376 = vsub.s32 0, %v375
      %v377 = vrot.slane %v372, %v376
      %v398 = vunpack.c.l.b16 %v337
      %v399 = vunpack.c.l.b16 %v338
      %v400 = vunpack.c.l.b16 %v339
      %v401 = vunpack.c.l.b16 %v340
      %v402 = vunpack.c.l.b16 %v341
      %v403 = vunpack.c.l.b16 %v342
      %v404 = vunpack.c.l.b16 %v343
      %v405 = vunpack.c.l.b16 %v344
      %v406 = vunpack.c.l.b16 %v345
      %v407 = vunpack.c.l.b16 %v346
      %v408 = vunpack.c.l.b16 %v347
      %v409 = vunpack.c.l.b16 %v348
      %v410 = vunpack.c.l.b16 %v349
      %v411 = vunpack.c.l.b16 %v350
      %v412 = vunpack.c.l.b16 %v351
      %v413 = vunpack.c.l.b16 %v352
      %v414 = vunpack.c.l.b16 %v353
      %v415 = vunpack.c.l.b16 %v354
      %v416 = vunpack.c.l.b16 %v355
      %v417 = vpack.c.b16 %v399, %v398
      %v418 = vpack.c.b16 %v401, %v400
      %v419 = vpack.c.b16 %v403, %v402
      %v420 = vpack.c.b16 %v405, %v404
      %v421 = vpack.c.b16 %v407, %v406
      %v422 = vpack.c.b16 %v409, %v408
      %v423 = vpack.c.b16 %v411, %v410
      %v424 = vpack.c.b16 %v413, %v412
      %v425 = vpack.c.b16 %v415, %v414
      %v426 = vpack.c.b16 %v416, %v416
      %v453 = vunpack.c.l.b16 %v356
      %v454 = vunpack.c.l.b16 %v357
      %v455 = vunpack.c.l.b16 %v358
      %v456 = vunpack.c.l.b16 %v359
      %v457 = vunpack.c.l.b16 %v360
      %v458 = vunpack.c.l.b16 %v361
      %v459 = vunpack.c.l.b16 %v362
      %v460 = vunpack.c.l.b16 %v363
      %v461 = vunpack.c.l.b16 %v364
      %v462 = vunpack.c.l.b16 %v365
      %v463 = vunpack.c.l.b16 %v366
      %v464 = vunpack.c.l.b16 %v367
      %v465 = vunpack.c.l.b16 %v368
      %v466 = vunpack.c.l.b16 %v369
      %v467 = vunpack.c.l.b16 %v370
      %v468 = vunpack.c.l.b16 %v371
      %v469 = vpack.c.b16 %v454, %v453
      %v470 = vpack.c.b16 %v456, %v455
      %v471 = vpack.c.b16 %v458, %v457
      %v472 = vpack.c.b16 %v460, %v459
      %v473 = vpack.c.b16 %v462, %v461
      %v474 = vpack.c.b16 %v464, %v463
      %v475 = vpack.c.b16 %v466, %v465
      %v476 = vpack.c.b16 %v468, %v467
      %485 = vmatprep.subr.bf16.mxu0 0
      %486 = vmatpush1.bf16.msra.mxu0 %v469
      %487 = vmatprep.subr.bf16.mxu0 0
      %488 = vmatpush1.bf16.msra.mxu0 %v470
      %489 = vmatprep.subr.bf16.mxu0 0
      %490 = vmatpush1.bf16.msra.mxu0 %v471
      %491 = vmatprep.subr.bf16.mxu0 0
      %492 = vmatpush1.bf16.msra.mxu0 %v472
      %493 = vmatprep.subr.bf16.mxu0 0
      %494 = vmatpush1.bf16.msra.mxu0 %v473
      %495 = vmatprep.subr.bf16.mxu0 0
      %496 = vmatpush1.bf16.msra.mxu0 %v474
      %497 = vmatprep.subr.bf16.mxu0 0
      %498 = vmatpush1.bf16.msra.mxu0 %v475
      %499 = vmatprep.subr.bf16.mxu0 0
      %500 = vmatpush1.bf16.msra.mxu0 %v476
      %501 = vmatprep.subr.bf16.mxu0 0
      %502 = vmatpush1.bf16.msra.mxu0 0
      %503 = vmatprep.subr.bf16.mxu0 0
      %504 = vmatpush1.bf16.msra.mxu0 0
      %505 = vmatprep.subr.bf16.mxu0 0
      %506 = vmatpush1.bf16.msra.mxu0 0
      %507 = vmatprep.subr.bf16.mxu0 0
      %508 = vmatpush1.bf16.msra.mxu0 0
      %509 = vmatprep.subr.bf16.mxu0 0
      %510 = vmatpush1.bf16.msra.mxu0 0
      %511 = vmatprep.subr.bf16.mxu0 0
      %512 = vmatpush1.bf16.msra.mxu0 0
      %513 = vmatprep.subr.bf16.mxu0 0
      %514 = vmatpush1.bf16.msra.mxu0 0
      %515 = vmatprep.subr.bf16.mxu0 0
      %516 = vmatpush1.bf16.msra.mxu0 0
      %517 = vmatprep.mubr.bf16.mxu0 0
      %518 = vmatmul.mubr.bf16.gmra.mrb[0].mxu0 %v417
      %v519 = vpop.f32.mrb[0].mxu0
      %v520 = vadd.f32 %v377, %v519
      %v521 = vpop.f32.mrb[0].mxu0
      %v522 = vpop.f32.mrb[0].mxu0
      %v523 = vadd.f32 %v377, %v522
      %v524 = vpop.f32.mrb[0].mxu0
      %525 = vmatprep.mubr.bf16.mxu0 0
      %526 = vmatmul.mubr.bf16.gmra.mrb[0].mxu0 %v418
      %v527 = vpop.f32.mrb[0].mxu0
      %v528 = vadd.f32 %v377, %v527
      %v529 = vpop.f32.mrb[0].mxu0
      %v530 = vpop.f32.mrb[0].mxu0
      %v531 = vadd.f32 %v377, %v530
      %v532 = vpop.f32.mrb[0].mxu0
      %533 = vmatprep.mubr.bf16.mxu0 0
      %534 = vmatmul.mubr.bf16.gmra.mrb[0].mxu0 %v419
      %v535 = vpop.f32.mrb[0].mxu0
      %v536 = vadd.f32 %v377, %v535
      %v537 = vpop.f32.mrb[0].mxu0
      %v538 = vpop.f32.mrb[0].mxu0
      %v539 = vadd.f32 %v377, %v538
      %v540 = vpop.f32.mrb[0].mxu0
      %541 = vmatprep.mubr.bf16.mxu0 0
      %542 = vmatmul.mubr.bf16.gmra.mrb[0].mxu0 %v420
      %v543 = vpop.f32.mrb[0].mxu0
      %v544 = vadd.f32 %v377, %v543
      %v545 = vpop.f32.mrb[0].mxu0
      %v546 = vpop.f32.mrb[0].mxu0
      %v547 = vadd.f32 %v377, %v546
      %v548 = vpop.f32.mrb[0].mxu0
      %549 = vmatprep.mubr.bf16.mxu0 0
      %550 = vmatmul.mubr.bf16.gmra.mrb[0].mxu0 %v421
      %v551 = vpop.f32.mrb[0].mxu0
      %v552 = vadd.f32 %v377, %v551
      %v553 = vpop.f32.mrb[0].mxu0
      %v554 = vpop.f32.mrb[0].mxu0
      %v555 = vadd.f32 %v377, %v554
      %v556 = vpop.f32.mrb[0].mxu0
      %557 = vmatprep.mubr.bf16.mxu0 0
      %558 = vmatmul.mubr.bf16.gmra.mrb[0].mxu0 %v422
      %v559 = vpop.f32.mrb[0].mxu0
      %v560 = vadd.f32 %v377, %v559
      %v561 = vpop.f32.mrb[0].mxu0
      %v562 = vpop.f32.mrb[0].mxu0
      %v563 = vadd.f32 %v377, %v562
      %v564 = vpop.f32.mrb[0].mxu0
      %565 = vmatprep.mubr.bf16.mxu0 0
      %566 = vmatmul.mubr.bf16.gmra.mrb[0].mxu0 %v423
      %v567 = vpop.f32.mrb[0].mxu0
      %v568 = vadd.f32 %v377, %v567
      %v569 = vpop.f32.mrb[0].mxu0
      %v570 = vpop.f32.mrb[0].mxu0
      %v571 = vadd.f32 %v377, %v570
      %v572 = vpop.f32.mrb[0].mxu0
      %573 = vmatprep.mubr.bf16.mxu0 0
      %574 = vmatmul.mubr.bf16.gmra.mrb[0].mxu0 %v424
      %v575 = vpop.f32.mrb[0].mxu0
      %v576 = vadd.f32 %v377, %v575
      %v577 = vpop.f32.mrb[0].mxu0
      %v578 = vpop.f32.mrb[0].mxu0
      %v579 = vadd.f32 %v377, %v578
      %v580 = vpop.f32.mrb[0].mxu0
      %581 = vmatprep.mubr.bf16.mxu0 0
      %582 = vmatmul.mubr.bf16.gmra.mrb[0].mxu0 %v425
      %v583 = vpop.f32.mrb[0].mxu0
      %v584 = vadd.f32 %v377, %v583
      %v585 = vpop.f32.mrb[0].mxu0
      %v586 = vpop.f32.mrb[0].mxu0
      %v587 = vadd.f32 %v377, %v586
      %v588 = vpop.f32.mrb[0].mxu0
      %589 = vmatprep.mubr.bf16.mxu0 0
      %590 = vmatmul.mubr.bf16.gmra.mrb[0].mxu0 %v426
      %v591 = vpop.f32.mrb[0].mxu0
      %v592 = vadd.f32 %v377, %v591
      %v593 = vpop.f32.mrb[0].mxu0
      %v594 = vpop.f32.mrb[0].mxu0
      %v595 = vpop.f32.mrb[0].mxu0
      %596 = vdwg.mxu0
      %vm597 = vcmp.gt.f32.partialorder %v520, 0.0
      %vm598 = vcmp.gt.f32.partialorder %v523, 0.0
      %vm599 = vcmp.gt.f32.partialorder %v528, 0.0
      %vm600 = vcmp.gt.f32.partialorder %v531, 0.0
      %vm601 = vcmp.gt.f32.partialorder %v536, 0.0
      %vm602 = vcmp.gt.f32.partialorder %v539, 0.0
      %vm603 = vcmp.gt.f32.partialorder %v544, 0.0
      %vm604 = vcmp.gt.f32.partialorder %v547, 0.0
      %vm605 = vcmp.gt.f32.partialorder %v552, 0.0
      %vm606 = vcmp.gt.f32.partialorder %v555, 0.0
      %vm607 = vcmp.gt.f32.partialorder %v560, 0.0
      %vm608 = vcmp.gt.f32.partialorder %v563, 0.0
      %vm609 = vcmp.gt.f32.partialorder %v568, 0.0
      %vm610 = vcmp.gt.f32.partialorder %v571, 0.0
      %vm611 = vcmp.gt.f32.partialorder %v576, 0.0
      %vm612 = vcmp.gt.f32.partialorder %v579, 0.0
      %vm613 = vcmp.gt.f32.partialorder %v584, 0.0
      %vm614 = vcmp.gt.f32.partialorder %v587, 0.0
      %vm615 = vcmp.gt.f32.partialorder %v592, 0.0
      %v616 = vmul.f32 %v520, 0.01
      %v617 = vmul.f32 %v523, 0.01
      %v618 = vmul.f32 %v528, 0.01
      %v619 = vmul.f32 %v531, 0.01
      %v620 = vmul.f32 %v536, 0.01
      %v621 = vmul.f32 %v539, 0.01
      %v622 = vmul.f32 %v544, 0.01
      %v623 = vmul.f32 %v547, 0.01
      %v624 = vmul.f32 %v552, 0.01
      %v625 = vmul.f32 %v555, 0.01
      %v626 = vmul.f32 %v560, 0.01
      %v627 = vmul.f32 %v563, 0.01
      %v628 = vmul.f32 %v568, 0.01
      %v629 = vmul.f32 %v571, 0.01
      %v630 = vmul.f32 %v576, 0.01
      %v631 = vmul.f32 %v579, 0.01
      %v632 = vmul.f32 %v584, 0.01
      %v633 = vmul.f32 %v587, 0.01
      %v634 = vmul.f32 %v592, 0.01
      %v635 = vsel %vm597, %v520, %v616
      %v636 = vsel %vm598, %v523, %v617
      %v637 = vsel %vm599, %v528, %v618
      %v638 = vsel %vm600, %v531, %v619
      %v639 = vsel %vm601, %v536, %v620
      %v640 = vsel %vm602, %v539, %v621
      %v641 = vsel %vm603, %v544, %v622
      %v642 = vsel %vm604, %v547, %v623
      %v643 = vsel %vm605, %v552, %v624
      %v644 = vsel %vm606, %v555, %v625
      %v645 = vsel %vm607, %v560, %v626
      %v646 = vsel %vm608, %v563, %v627
      %v647 = vsel %vm609, %v568, %v628
      %v648 = vsel %vm610, %v571, %v629
      %v649 = vsel %vm611, %v576, %v630
      %v650 = vsel %vm612, %v579, %v631
      %v651 = vsel %vm613, %v584, %v632
      %v652 = vsel %vm614, %v587, %v633
      %v653 = vsel %vm615, %v592, %v634
      %v654 = vld [vmem:[%s3] sm:$0x1]
      %v656 = vlaneseq
      %v657 = vshrl.u32 %v656, 7
      %v658 = vsub.s32 0, %v657
      %v659 = vrot.slane %v654, %v658
      %v661 = vmul.f32 %v635, %v659
      %v662 = vmul.f32 %v636, %v659
      %v663 = vmul.f32 %v637, %v659
      %v664 = vmul.f32 %v638, %v659
      %v665 = vmul.f32 %v639, %v659
      %v666 = vmul.f32 %v640, %v659
      %v667 = vmul.f32 %v641, %v659
      %v668 = vmul.f32 %v642, %v659
      %v669 = vmul.f32 %v643, %v659
      %v670 = vmul.f32 %v644, %v659
      %v671 = vmul.f32 %v645, %v659
      %v672 = vmul.f32 %v646, %v659
      %v673 = vmul.f32 %v647, %v659
      %v674 = vmul.f32 %v648, %v659
      %v675 = vmul.f32 %v649, %v659
      %v676 = vmul.f32 %v650, %v659
      %v677 = vmul.f32 %v651, %v659
      %v678 = vmul.f32 %v652, %v659
      %v679 = vmul.f32 %v653, %v659
      %v680 = vld [vmem:[%s4] sm:$0x1]
      %v682 = vlaneseq
      %v683 = vshrl.u32 %v682, 7
      %v684 = vsub.s32 0, %v683
      %v685 = vrot.slane %v680, %v684
      %v687 = vadd.f32 %v661, %v685
      %v688 = vadd.f32 %v662, %v685
      %v689 = vadd.f32 %v663, %v685
      %v690 = vadd.f32 %v664, %v685
      %v691 = vadd.f32 %v665, %v685
      %v692 = vadd.f32 %v666, %v685
      %v693 = vadd.f32 %v667, %v685
      %v694 = vadd.f32 %v668, %v685
      %v695 = vadd.f32 %v669, %v685
      %v696 = vadd.f32 %v670, %v685
      %v697 = vadd.f32 %v671, %v685
      %v698 = vadd.f32 %v672, %v685
      %v699 = vadd.f32 %v673, %v685
      %v700 = vadd.f32 %v674, %v685
      %v701 = vadd.f32 %v675, %v685
      %v702 = vadd.f32 %v676, %v685
      %v703 = vadd.f32 %v677, %v685
      %v704 = vadd.f32 %v678, %v685
      %v705 = vadd.f32 %v679, %v685
      %v706 = vpack.c.bf16 %v688, %v687
      %v707 = vpack.c.bf16 %v690, %v689
      %v708 = vpack.c.bf16 %v692, %v691
      %v709 = vpack.c.bf16 %v694, %v693
      %v710 = vpack.c.bf16 %v696, %v695
      %v711 = vpack.c.bf16 %v698, %v697
      %v712 = vpack.c.bf16 %v700, %v699
      %v713 = vpack.c.bf16 %v702, %v701
      %v714 = vpack.c.bf16 %v704, %v703
      %v715 = vpack.c.bf16 %v705, %v705
      %v716 = vld [vmem:[%s5] sm:$0xf]
      %v717 = vld [vmem:[%s5 + $0x4] sm:$0xf]
      %v718 = vld [vmem:[%s5 + $0x8] sm:$0xf]
      %v719 = vld [vmem:[%s5 + $0xc] sm:$0xf]
      %v720 = vld [vmem:[%s5 + $0x10] sm:$0xf]
      %v721 = vld [vmem:[%s5 + $0x14] sm:$0xf]
      %v722 = vld [vmem:[%s5 + $0x18] sm:$0xf]
      %v723 = vld [vmem:[%s5 + $0x1c] sm:$0xf]
      %v724 = vld [vmem:[%s5 + $0x20] sm:$0xf]
      %v725 = vld [vmem:[%s5 + $0x24] sm:$0xf]
      %v726 = vld [vmem:[%s5 + $0x28] sm:$0xf]
      %v727 = vld [vmem:[%s5 + $0x2c] sm:$0xf]
      %v728 = vld [vmem:[%s5 + $0x30] sm:$0xf]
      %v729 = vld [vmem:[%s5 + $0x34] sm:$0xf]
      %v730 = vld [vmem:[%s5 + $0x38] sm:$0xf]
      %v731 = vld [vmem:[%s5 + $0x3c] sm:$0xf]
      %v732 = vld [vmem:[%s6] sm:$0x1]
      %v734 = vlaneseq
      %v735 = vshrl.u32 %v734, 7
      %v736 = vsub.s32 0, %v735
      %v737 = vrot.slane %v732, %v736
      %v755 = vunpack.c.l.b16 %v716
      %v756 = vunpack.c.l.b16 %v717
      %v757 = vunpack.c.l.b16 %v718
      %v758 = vunpack.c.l.b16 %v719
      %v759 = vunpack.c.l.b16 %v720
      %v760 = vunpack.c.l.b16 %v721
      %v761 = vunpack.c.l.b16 %v722
      %v762 = vunpack.c.l.b16 %v723
      %v763 = vunpack.c.l.b16 %v724
      %v764 = vunpack.c.l.b16 %v725
      %v765 = vunpack.c.l.b16 %v726
      %v766 = vunpack.c.l.b16 %v727
      %v767 = vunpack.c.l.b16 %v728
      %v768 = vunpack.c.l.b16 %v729
      %v769 = vunpack.c.l.b16 %v730
      %v770 = vunpack.c.l.b16 %v731
      %v771 = vpack.c.b16 %v756, %v755
      %v772 = vpack.c.b16 %v758, %v757
      %v773 = vpack.c.b16 %v760, %v759
      %v774 = vpack.c.b16 %v762, %v761
      %v775 = vpack.c.b16 %v764, %v763
      %v776 = vpack.c.b16 %v766, %v765
      %v777 = vpack.c.b16 %v768, %v767
      %v778 = vpack.c.b16 %v770, %v769
      %787 = vmatprep.subr.bf16.mxu0 0
      %788 = vmatpush1.bf16.msra.mxu0 %v771
      %789 = vmatprep.subr.bf16.mxu0 0
      %790 = vmatpush1.bf16.msra.mxu0 %v772
      %791 = vmatprep.subr.bf16.mxu0 0
      %792 = vmatpush1.bf16.msra.mxu0 %v773
      %793 = vmatprep.subr.bf16.mxu0 0
      %794 = vmatpush1.bf16.msra.mxu0 %v774
      %795 = vmatprep.subr.bf16.mxu0 0
      %796 = vmatpush1.bf16.msra.mxu0 %v775
      %797 = vmatprep.subr.bf16.mxu0 0
      %798 = vmatpush1.bf16.msra.mxu0 %v776
      %799 = vmatprep.subr.bf16.mxu0 0
      %800 = vmatpush1.bf16.msra.mxu0 %v777
      %801 = vmatprep.subr.bf16.mxu0 0
      %802 = vmatpush1.bf16.msra.mxu0 %v778
      %803 = vmatprep.subr.bf16.mxu0 0
      %804 = vmatpush1.bf16.msra.mxu0 0
      %805 = vmatprep.subr.bf16.mxu0 0
      %806 = vmatpush1.bf16.msra.mxu0 0
      %807 = vmatprep.subr.bf16.mxu0 0
      %808 = vmatpush1.bf16.msra.mxu0 0
      %809 = vmatprep.subr.bf16.mxu0 0
      %810 = vmatpush1.bf16.msra.mxu0 0
      %811 = vmatprep.subr.bf16.mxu0 0
      %812 = vmatpush1.bf16.msra.mxu0 0
      %813 = vmatprep.subr.bf16.mxu0 0
      %814 = vmatpush1.bf16.msra.mxu0 0
      %815 = vmatprep.subr.bf16.mxu0 0
      %816 = vmatpush1.bf16.msra.mxu0 0
      %817 = vmatprep.subr.bf16.mxu0 0
      %818 = vmatpush1.bf16.msra.mxu0 0
      %819 = vmatprep.mubr.bf16.mxu0 0
      %820 = vmatmul.mubr.bf16.gmra.mrb[0].mxu0 %v706
      %v821 = vpop.f32.mrb[0].mxu0
      %v822 = vadd.f32 %v737, %v821
      %v823 = vpop.f32.mrb[0].mxu0
      %v824 = vpop.f32.mrb[0].mxu0
      %v825 = vadd.f32 %v737, %v824
      %v826 = vpop.f32.mrb[0].mxu0
      %827 = vmatprep.mubr.bf16.mxu0 0
      %828 = vmatmul.mubr.bf16.gmra.mrb[0].mxu0 %v707
      %v829 = vpop.f32.mrb[0].mxu0
      %v830 = vadd.f32 %v737, %v829
      %v831 = vpop.f32.mrb[0].mxu0
      %v832 = vpop.f32.mrb[0].mxu0
      %v833 = vadd.f32 %v737, %v832
      %v834 = vpop.f32.mrb[0].mxu0
      %835 = vmatprep.mubr.bf16.mxu0 0
      %836 = vmatmul.mubr.bf16.gmra.mrb[0].mxu0 %v708
      %v837 = vpop.f32.mrb[0].mxu0
      %v838 = vadd.f32 %v737, %v837
      %v839 = vpop.f32.mrb[0].mxu0
      %v840 = vpop.f32.mrb[0].mxu0
      %v841 = vadd.f32 %v737, %v840
      %v842 = vpop.f32.mrb[0].mxu0
      %843 = vmatprep.mubr.bf16.mxu0 0
      %844 = vmatmul.mubr.bf16.gmra.mrb[0].mxu0 %v709
      %v845 = vpop.f32.mrb[0].mxu0
      %v846 = vadd.f32 %v737, %v845
      %v847 = vpop.f32.mrb[0].mxu0
      %v848 = vpop.f32.mrb[0].mxu0
      %v849 = vadd.f32 %v737, %v848
      %v850 = vpop.f32.mrb[0].mxu0
      %851 = vmatprep.mubr.bf16.mxu0 0
      %852 = vmatmul.mubr.bf16.gmra.mrb[0].mxu0 %v710
      %v853 = vpop.f32.mrb[0].mxu0
      %v854 = vadd.f32 %v737, %v853
      %v855 = vpop.f32.mrb[0].mxu0
      %v856 = vpop.f32.mrb[0].mxu0
      %v857 = vadd.f32 %v737, %v856
      %v858 = vpop.f32.mrb[0].mxu0
      %859 = vmatprep.mubr.bf16.mxu0 0
      %860 = vmatmul.mubr.bf16.gmra.mrb[0].mxu0 %v711
      %v861 = vpop.f32.mrb[0].mxu0
      %v862 = vadd.f32 %v737, %v861
      %v863 = vpop.f32.mrb[0].mxu0
      %v864 = vpop.f32.mrb[0].mxu0
      %v865 = vadd.f32 %v737, %v864
      %v866 = vpop.f32.mrb[0].mxu0
      %867 = vmatprep.mubr.bf16.mxu0 0
      %868 = vmatmul.mubr.bf16.gmra.mrb[0].mxu0 %v712
      %v869 = vpop.f32.mrb[0].mxu0
      %v870 = vadd.f32 %v737, %v869
      %v871 = vpop.f32.mrb[0].mxu0
      %v872 = vpop.f32.mrb[0].mxu0
      %v873 = vadd.f32 %v737, %v872
      %v874 = vpop.f32.mrb[0].mxu0
      %875 = vmatprep.mubr.bf16.mxu0 0
      %876 = vmatmul.mubr.bf16.gmra.mrb[0].mxu0 %v713
      %v877 = vpop.f32.mrb[0].mxu0
      %v878 = vadd.f32 %v737, %v877
      %v879 = vpop.f32.mrb[0].mxu0
      %v880 = vpop.f32.mrb[0].mxu0
      %v881 = vadd.f32 %v737, %v880
      %v882 = vpop.f32.mrb[0].mxu0
      %883 = vmatprep.mubr.bf16.mxu0 0
      %884 = vmatmul.mubr.bf16.gmra.mrb[0].mxu0 %v714
      %v885 = vpop.f32.mrb[0].mxu0
      %v886 = vadd.f32 %v737, %v885
      %v887 = vpop.f32.mrb[0].mxu0
      %v888 = vpop.f32.mrb[0].mxu0
      %v889 = vadd.f32 %v737, %v888
      %v890 = vpop.f32.mrb[0].mxu0
      %891 = vmatprep.mubr.bf16.mxu0 0
      %892 = vmatmul.mubr.bf16.gmra.mrb[0].mxu0 %v715
      %v893 = vpop.f32.mrb[0].mxu0
      %v894 = vadd.f32 %v737, %v893
      %v895 = vpop.f32.mrb[0].mxu0
      %v896 = vpop.f32.mrb[0].mxu0
      %v897 = vpop.f32.mrb[0].mxu0
      %898 = vdwg.mxu0
      %vm899 = vcmp.gt.f32.partialorder %v822, 0.0
      %vm900 = vcmp.gt.f32.partialorder %v825, 0.0
      %vm901 = vcmp.gt.f32.partialorder %v830, 0.0
      %vm902 = vcmp.gt.f32.partialorder %v833, 0.0
      %vm903 = vcmp.gt.f32.partialorder %v838, 0.0
      %vm904 = vcmp.gt.f32.partialorder %v841, 0.0
      %vm905 = vcmp.gt.f32.partialorder %v846, 0.0
      %vm906 = vcmp.gt.f32.partialorder %v849, 0.0
      %vm907 = vcmp.gt.f32.partialorder %v854, 0.0
      %vm908 = vcmp.gt.f32.partialorder %v857, 0.0
      %vm909 = vcmp.gt.f32.partialorder %v862, 0.0
      %vm910 = vcmp.gt.f32.partialorder %v865, 0.0
      %vm911 = vcmp.gt.f32.partialorder %v870, 0.0
      %vm912 = vcmp.gt.f32.partialorder %v873, 0.0
      %vm913 = vcmp.gt.f32.partialorder %v878, 0.0
      %vm914 = vcmp.gt.f32.partialorder %v881, 0.0
      %vm915 = vcmp.gt.f32.partialorder %v886, 0.0
      %vm916 = vcmp.gt.f32.partialorder %v889, 0.0
      %vm917 = vcmp.gt.f32.partialorder %v894, 0.0
      %v918 = vmul.f32 %v822, 0.01
      %v919 = vmul.f32 %v825, 0.01
      %v920 = vmul.f32 %v830, 0.01
      %v921 = vmul.f32 %v833, 0.01
      %v922 = vmul.f32 %v838, 0.01
      %v923 = vmul.f32 %v841, 0.01
      %v924 = vmul.f32 %v846, 0.01
      %v925 = vmul.f32 %v849, 0.01
      %v926 = vmul.f32 %v854, 0.01
      %v927 = vmul.f32 %v857, 0.01
      %v928 = vmul.f32 %v862, 0.01
      %v929 = vmul.f32 %v865, 0.01
      %v930 = vmul.f32 %v870, 0.01
      %v931 = vmul.f32 %v873, 0.01
      %v932 = vmul.f32 %v878, 0.01
      %v933 = vmul.f32 %v881, 0.01
      %v934 = vmul.f32 %v886, 0.01
      %v935 = vmul.f32 %v889, 0.01
      %v936 = vmul.f32 %v894, 0.01
      %v937 = vsel %vm899, %v822, %v918
      %v938 = vsel %vm900, %v825, %v919
      %v939 = vsel %vm901, %v830, %v920
      %v940 = vsel %vm902, %v833, %v921
      %v941 = vsel %vm903, %v838, %v922
      %v942 = vsel %vm904, %v841, %v923
      %v943 = vsel %vm905, %v846, %v924
      %v944 = vsel %vm906, %v849, %v925
      %v945 = vsel %vm907, %v854, %v926
      %v946 = vsel %vm908, %v857, %v927
      %v947 = vsel %vm909, %v862, %v928
      %v948 = vsel %vm910, %v865, %v929
      %v949 = vsel %vm911, %v870, %v930
      %v950 = vsel %vm912, %v873, %v931
      %v951 = vsel %vm913, %v878, %v932
      %v952 = vsel %vm914, %v881, %v933
      %v953 = vsel %vm915, %v886, %v934
      %v954 = vsel %vm916, %v889, %v935
      %v955 = vsel %vm917, %v894, %v936
      %v956 = vpack.c.bf16 %v938, %v937
      %v957 = vpack.c.bf16 %v940, %v939
      %v958 = vpack.c.bf16 %v942, %v941
      %v959 = vpack.c.bf16 %v944, %v943
      %v960 = vpack.c.bf16 %v946, %v945
      %v961 = vpack.c.bf16 %v948, %v947
      %v962 = vpack.c.bf16 %v950, %v949
      %v963 = vpack.c.bf16 %v952, %v951
      %v964 = vpack.c.bf16 %v954, %v953
      %v965 = vpack.c.bf16 %v955, %v955
      %v966 = vld [vmem:[%s7] sm:$0xf]
      %v967 = vld [vmem:[%s7 + $0x4] sm:$0xf]
      %v968 = vld [vmem:[%s7 + $0x8] sm:$0xf]
      %v969 = vld [vmem:[%s7 + $0xc] sm:$0xf]
      %v970 = vld [vmem:[%s7 + $0x10] sm:$0xf]
      %v971 = vld [vmem:[%s7 + $0x14] sm:$0xf]
      %v972 = vld [vmem:[%s7 + $0x18] sm:$0xf]
      %v973 = vld [vmem:[%s7 + $0x1c] sm:$0xf]
      %v974 = vld [vmem:[%s7 + $0x20] sm:$0xf]
      %v975 = vld [vmem:[%s7 + $0x24] sm:$0xf]
      %v976 = vld [vmem:[%s7 + $0x28] sm:$0xf]
      %v977 = vld [vmem:[%s7 + $0x2c] sm:$0xf]
      %v978 = vld [vmem:[%s7 + $0x30] sm:$0xf]
      %v979 = vld [vmem:[%s7 + $0x34] sm:$0xf]
      %v980 = vld [vmem:[%s7 + $0x38] sm:$0xf]
      %v981 = vld [vmem:[%s7 + $0x3c] sm:$0xf]
      %v982 = vld [vmem:[%s8] sm:$0x1]
      %v984 = vlaneseq
      %v985 = vshrl.u32 %v984, 7
      %v986 = vsub.s32 0, %v985
      %v987 = vrot.slane %v982, %v986
      %v1005 = vunpack.c.l.b16 %v966
      %v1006 = vunpack.c.l.b16 %v967
      %v1007 = vunpack.c.l.b16 %v968
      %v1008 = vunpack.c.l.b16 %v969
      %v1009 = vunpack.c.l.b16 %v970
      %v1010 = vunpack.c.l.b16 %v971
      %v1011 = vunpack.c.l.b16 %v972
      %v1012 = vunpack.c.l.b16 %v973
      %v1013 = vunpack.c.l.b16 %v974
      %v1014 = vunpack.c.l.b16 %v975
      %v1015 = vunpack.c.l.b16 %v976
      %v1016 = vunpack.c.l.b16 %v977
      %v1017 = vunpack.c.l.b16 %v978
      %v1018 = vunpack.c.l.b16 %v979
      %v1019 = vunpack.c.l.b16 %v980
      %v1020 = vunpack.c.l.b16 %v981
      %v1021 = vpack.c.b16 %v1006, %v1005
      %v1022 = vpack.c.b16 %v1008, %v1007
      %v1023 = vpack.c.b16 %v1010, %v1009
      %v1024 = vpack.c.b16 %v1012, %v1011
      %v1025 = vpack.c.b16 %v1014, %v1013
      %v1026 = vpack.c.b16 %v1016, %v1015
      %v1027 = vpack.c.b16 %v1018, %v1017
      %v1028 = vpack.c.b16 %v1020, %v1019
      %1037 = vmatprep.subr.bf16.mxu0 0
      %1038 = vmatpush1.bf16.msra.mxu0 %v1021
      %1039 = vmatprep.subr.bf16.mxu0 0
      %1040 = vmatpush1.bf16.msra.mxu0 %v1022
      %1041 = vmatprep.subr.bf16.mxu0 0
      %1042 = vmatpush1.bf16.msra.mxu0 %v1023
      %1043 = vmatprep.subr.bf16.mxu0 0
      %1044 = vmatpush1.bf16.msra.mxu0 %v1024
      %1045 = vmatprep.subr.bf16.mxu0 0
      %1046 = vmatpush1.bf16.msra.mxu0 %v1025
      %1047 = vmatprep.subr.bf16.mxu0 0
      %1048 = vmatpush1.bf16.msra.mxu0 %v1026
      %1049 = vmatprep.subr.bf16.mxu0 0
      %1050 = vmatpush1.bf16.msra.mxu0 %v1027
      %1051 = vmatprep.subr.bf16.mxu0 0
      %1052 = vmatpush1.bf16.msra.mxu0 %v1028
      %1053 = vmatprep.subr.bf16.mxu0 0
      %1054 = vmatpush1.bf16.msra.mxu0 0
      %1055 = vmatprep.subr.bf16.mxu0 0
      %1056 = vmatpush1.bf16.msra.mxu0 0
      %1057 = vmatprep.subr.bf16.mxu0 0
      %1058 = vmatpush1.bf16.msra.mxu0 0
      %1059 = vmatprep.subr.bf16.mxu0 0
      %1060 = vmatpush1.bf16.msra.mxu0 0
      %1061 = vmatprep.subr.bf16.mxu0 0
      %1062 = vmatpush1.bf16.msra.mxu0 0
      %1063 = vmatprep.subr.bf16.mxu0 0
      %1064 = vmatpush1.bf16.msra.mxu0 0
      %1065 = vmatprep.subr.bf16.mxu0 0
      %1066 = vmatpush1.bf16.msra.mxu0 0
      %1067 = vmatprep.subr.bf16.mxu0 0
      %1068 = vmatpush1.bf16.msra.mxu0 0
      %1069 = vmatprep.mubr.bf16.mxu0 0
      %1070 = vmatmul.mubr.bf16.gmra.mrb[0].mxu0 %v956
      %v1071 = vpop.f32.mrb[0].mxu0
      %v1072 = vadd.f32 %v987, %v1071
      %v1073 = vpop.f32.mrb[0].mxu0
      %v1074 = vpop.f32.mrb[0].mxu0
      %v1075 = vadd.f32 %v987, %v1074
      %v1076 = vpop.f32.mrb[0].mxu0
      %1077 = vmatprep.mubr.bf16.mxu0 0
      %1078 = vmatmul.mubr.bf16.gmra.mrb[0].mxu0 %v957
      %v1079 = vpop.f32.mrb[0].mxu0
      %v1080 = vadd.f32 %v987, %v1079
      %v1081 = vpop.f32.mrb[0].mxu0
      %v1082 = vpop.f32.mrb[0].mxu0
      %v1083 = vadd.f32 %v987, %v1082
      %v1084 = vpop.f32.mrb[0].mxu0
      %1085 = vmatprep.mubr.bf16.mxu0 0
      %1086 = vmatmul.mubr.bf16.gmra.mrb[0].mxu0 %v958
      %v1087 = vpop.f32.mrb[0].mxu0
      %v1088 = vadd.f32 %v987, %v1087
      %v1089 = vpop.f32.mrb[0].mxu0
      %v1090 = vpop.f32.mrb[0].mxu0
      %v1091 = vadd.f32 %v987, %v1090
      %v1092 = vpop.f32.mrb[0].mxu0
      %1093 = vmatprep.mubr.bf16.mxu0 0
      %1094 = vmatmul.mubr.bf16.gmra.mrb[0].mxu0 %v959
      %v1095 = vpop.f32.mrb[0].mxu0
      %v1096 = vadd.f32 %v987, %v1095
      %v1097 = vpop.f32.mrb[0].mxu0
      %v1098 = vpop.f32.mrb[0].mxu0
      %v1099 = vadd.f32 %v987, %v1098
      %v1100 = vpop.f32.mrb[0].mxu0
      %1101 = vmatprep.mubr.bf16.mxu0 0
      %1102 = vmatmul.mubr.bf16.gmra.mrb[0].mxu0 %v960
      %v1103 = vpop.f32.mrb[0].mxu0
      %v1104 = vadd.f32 %v987, %v1103
      %v1105 = vpop.f32.mrb[0].mxu0
      %v1106 = vpop.f32.mrb[0].mxu0
      %v1107 = vadd.f32 %v987, %v1106
      %v1108 = vpop.f32.mrb[0].mxu0
      %1109 = vmatprep.mubr.bf16.mxu0 0
      %1110 = vmatmul.mubr.bf16.gmra.mrb[0].mxu0 %v961
      %v1111 = vpop.f32.mrb[0].mxu0
      %v1112 = vadd.f32 %v987, %v1111
      %v1113 = vpop.f32.mrb[0].mxu0
      %v1114 = vpop.f32.mrb[0].mxu0
      %v1115 = vadd.f32 %v987, %v1114
      %v1116 = vpop.f32.mrb[0].mxu0
      %1117 = vmatprep.mubr.bf16.mxu0 0
      %1118 = vmatmul.mubr.bf16.gmra.mrb[0].mxu0 %v962
      %v1119 = vpop.f32.mrb[0].mxu0
      %v1120 = vadd.f32 %v987, %v1119
      %v1121 = vpop.f32.mrb[0].mxu0
      %v1122 = vpop.f32.mrb[0].mxu0
      %v1123 = vadd.f32 %v987, %v1122
      %v1124 = vpop.f32.mrb[0].mxu0
      %1125 = vmatprep.mubr.bf16.mxu0 0
      %1126 = vmatmul.mubr.bf16.gmra.mrb[0].mxu0 %v963
      %v1127 = vpop.f32.mrb[0].mxu0
      %v1128 = vadd.f32 %v987, %v1127
      %v1129 = vpop.f32.mrb[0].mxu0
      %v1130 = vpop.f32.mrb[0].mxu0
      %v1131 = vadd.f32 %v987, %v1130
      %v1132 = vpop.f32.mrb[0].mxu0
      %1133 = vmatprep.mubr.bf16.mxu0 0
      %1134 = vmatmul.mubr.bf16.gmra.mrb[0].mxu0 %v964
      %v1135 = vpop.f32.mrb[0].mxu0
      %v1136 = vadd.f32 %v987, %v1135
      %v1137 = vpop.f32.mrb[0].mxu0
      %v1138 = vpop.f32.mrb[0].mxu0
      %v1139 = vadd.f32 %v987, %v1138
      %v1140 = vpop.f32.mrb[0].mxu0
      %1141 = vmatprep.mubr.bf16.mxu0 0
      %1142 = vmatmul.mubr.bf16.gmra.mrb[0].mxu0 %v965
      %v1143 = vpop.f32.mrb[0].mxu0
      %v1144 = vadd.f32 %v987, %v1143
      %v1145 = vpop.f32.mrb[0].mxu0
      %v1146 = vpop.f32.mrb[0].mxu0
      %v1147 = vpop.f32.mrb[0].mxu0
      %1148 = vdwg.mxu0
      %v1149 = vpack.c.bf16 %v1075, %v1072
      %v1150 = vpack.c.bf16 %v1083, %v1080
      %v1151 = vpack.c.bf16 %v1091, %v1088
      %v1152 = vpack.c.bf16 %v1099, %v1096
      %v1153 = vpack.c.bf16 %v1107, %v1104
      %v1154 = vpack.c.bf16 %v1115, %v1112
      %v1155 = vpack.c.bf16 %v1123, %v1120
      %v1156 = vpack.c.bf16 %v1131, %v1128
      %v1157 = vpack.c.bf16 %v1139, %v1136
      %v1158 = vpack.c.bf16 %v1144, %v1144
      %v1169 = vunpack.c.l.b16 %v1149
      %v1170 = vunpack.c.h.b16 %v1149
      %v1171 = vunpack.c.l.b16 %v1150
      %v1172 = vunpack.c.h.b16 %v1150
      %v1173 = vunpack.c.l.b16 %v1151
      %v1174 = vunpack.c.h.b16 %v1151
      %v1175 = vunpack.c.l.b16 %v1152
      %v1176 = vunpack.c.h.b16 %v1152
      %v1177 = vunpack.c.l.b16 %v1153
      %v1178 = vunpack.c.h.b16 %v1153
      %v1179 = vunpack.c.l.b16 %v1154
      %v1180 = vunpack.c.h.b16 %v1154
      %v1181 = vunpack.c.l.b16 %v1155
      %v1182 = vunpack.c.h.b16 %v1155
      %v1183 = vunpack.c.l.b16 %v1156
      %v1184 = vunpack.c.h.b16 %v1156
      %v1185 = vunpack.c.l.b16 %v1157
      %v1186 = vunpack.c.h.b16 %v1157
      %v1187 = vunpack.c.l.b16 %v1158
      %v1188 = vpack.c.b16 %v1169, %v1169
      %v1189 = vpack.c.b16 %v1170, %v1170
      %v1190 = vpack.c.b16 %v1171, %v1171
      %v1191 = vpack.c.b16 %v1172, %v1172
      %v1192 = vpack.c.b16 %v1173, %v1173
      %v1193 = vpack.c.b16 %v1174, %v1174
      %v1194 = vpack.c.b16 %v1175, %v1175
      %v1195 = vpack.c.b16 %v1176, %v1176
      %v1196 = vpack.c.b16 %v1177, %v1177
      %v1197 = vpack.c.b16 %v1178, %v1178
      %v1198 = vpack.c.b16 %v1179, %v1179
      %v1199 = vpack.c.b16 %v1180, %v1180
      %v1200 = vpack.c.b16 %v1181, %v1181
      %v1201 = vpack.c.b16 %v1182, %v1182
      %v1202 = vpack.c.b16 %v1183, %v1183
      %v1203 = vpack.c.b16 %v1184, %v1184
      %v1204 = vpack.c.b16 %v1185, %v1185
      %v1205 = vpack.c.b16 %v1186, %v1186
      %v1206 = vpack.c.b16 %v1187, %v1187
      %1226 = vst [vmem:[%s334] sm:$0xf] %v1188
      %1227 = vst [vmem:[%s334 + $0x4] sm:$0xf] %v1189
      %1228 = vst [vmem:[%s334 + $0x8] sm:$0xf] %v1190
      %1229 = vst [vmem:[%s334 + $0xc] sm:$0xf] %v1191
      %1230 = vst [vmem:[%s334 + $0x10] sm:$0xf] %v1192
      %1231 = vst [vmem:[%s334 + $0x14] sm:$0xf] %v1193
      %1232 = vst [vmem:[%s334 + $0x18] sm:$0xf] %v1194
      %1233 = vst [vmem:[%s334 + $0x1c] sm:$0xf] %v1195
      %1234 = vst [vmem:[%s334 + $0x20] sm:$0xf] %v1196
      %1235 = vst [vmem:[%s334 + $0x24] sm:$0xf] %v1197
      %1236 = vst [vmem:[%s334 + $0x28] sm:$0xf] %v1198
      %1237 = vst [vmem:[%s334 + $0x2c] sm:$0xf] %v1199
      %1238 = vst [vmem:[%s334 + $0x30] sm:$0xf] %v1200
      %1239 = vst [vmem:[%s334 + $0x34] sm:$0xf] %v1201
      %1240 = vst [vmem:[%s334 + $0x38] sm:$0xf] %v1202
      %1241 = vst [vmem:[%s334 + $0x3c] sm:$0xf] %v1203
      %1242 = vst [vmem:[%s334 + $0x40] sm:$0xf] %v1204
      %1243 = vst [vmem:[%s334 + $0x44] sm:$0xf] %v1205
      %1244 = vst [vmem:[%s334 + $0x48] sm:$0xf] %v1206
      %s1245 = smul.u32 19, %s20
      %p1246 = scmp.lt.s32.totalorder %s1245, 37
      %s1247 = scalar_select %p1246, %s1245, 37
      %s1248 = smul.addr %s1247, 4
      %s1249 = scalar_lea.vmem %s9, %s1248
      // Predicated region
      $region57: #{fedmaldetect_forward.3} parent=55 // pred_check
        %p1250 = pneg %p232
      $region58: #{fedmaldetect_forward.3} parent=55 // pred_check_branch
        %1252 = sbr.rel (%p1250) target = $region60
      $region59: #{fedmaldetect_forward.3} parent=55 // pred_region
        %s1253 = smul.u32 19, %s20
      $region60: #{fedmaldetect_forward.3} parent=55 // pred_fallthru
        _
    $region56: #{fedmaldetect_forward.3} parent=5 // pred_fallthru
      _
    %p1254 = scmp.le.s32.totalorder 2, %s15
    // Predicated region
    $region61: #{fedmaldetect_forward.3} parent=5 // pred_check
      %p1255 = pneg %p1254
    $region62: #{fedmaldetect_forward.3} parent=5 // pred_check_branch
      %1257 = sbr.rel (%p1255) target = $region64
    $region63: #{fedmaldetect_forward.3} parent=5 // pred_region
      %s1258 = ssub.s32 %s15, 2
      // Predicated region
      $region65: #{fedmaldetect_forward.3} parent=63 // pred_check
        %p1259 = pneg %p238
      $region66: #{fedmaldetect_forward.3} parent=63 // pred_check_branch
        %1261 = sbr.rel (%p1259) target = $region68
      $region67: #{fedmaldetect_forward.3} parent=63 // pred_region
        %s1262 = smul.u32 19, %s21
        %p1263 = scmp.lt.s32.totalorder %s1262, 37
        %s1264 = scalar_select %p1263, %s1262, 37
        %s1265 = smul.addr %s1264, 4
        %s1266 = scalar_lea.vmem %s9, %s1265
      $region68: #{fedmaldetect_forward.3} parent=63 // pred_fallthru
        _
    $region64: #{fedmaldetect_forward.3} parent=5 // pred_fallthru
      _
  $region6: #{fedmaldetect_forward.3} parent=0 // loop_footer
    %s19 = sadd.s32 1, %s15
  $region7: #{fedmaldetect_forward.3} parent=0 // loop_footer_branch
    %14 = sbr.rel target = $region3
  $region8: #{fedmaldetect_forward.3} parent=0 // loop_exit
    _

</llo_original>
